<compile_context>
chip_gen: v6e
topology: v6e:2x2x1
jax: 0.10.0
libtpu: 0.0.40
codegen_flags: <defaults>
</compile_context>

<pallas_src>
import jax
import jax.numpy as jnp
from jax.experimental import pallas as pl
from jax.experimental.pallas import tpu as pltpu


# Conservative budget: fits v7x's 64 MiB physical VMEM per TensorCore with
# headroom for compiler-internal scratch; v5e/v6e have 128 MiB physical.
_VMEM_BUDGET_BYTES = 48 * 1024 * 1024
_MAX_TILE_L = 4096            # diminishing returns past this (overhead << DMA)


def decoupling_kernel(xT_ref, w1_ref, wdT_ref, w3_ref, b3_ref, out_ref):
    # xT_ref : (1, S, tl)       feature_map block, L on the lane axis
    # w1_ref : (d1, S)   bf16   fc_1 weight (PyTorch layout)
    # wdT_ref: (d1, C)   f32    fc_2(word) precomputed, transposed
    # w3_ref : (d2, d1)  bf16   fc_3 weight (PyTorch layout)
    # b3_ref : (d2, 1)   f32    fc_3 bias
    # out_ref: (1, C, d2, tl)   output block of (B, C, d2, L_pad)
    xT = xT_ref[0].astype(jnp.bfloat16)                       # (S, tl)

    # fc_1 in transposed form: h^T = W1 @ x^T  -> (d1, tl), f32 accumulation.
    hT = jnp.dot(w1_ref[...], xT, preferred_element_type=jnp.float32)

    w3 = w3_ref[...]                                          # (d2, d1) bf16
    wdT = wdT_ref[...]                                        # (d1, C)  f32

    d2, tl = out_ref.shape[2], out_ref.shape[3]
    # Hoist the bias broadcast out of the class loop (JAX does not CSE it).
    b3_b = jnp.broadcast_to(b3_ref[...], (d2, tl))            # (d2, tl) f32

    num_classes = wdT.shape[1]
    # Small static class count: unrolled loop, all classes handled in one
    # grid step so fc_1 above is amortized across them.
    for c in range(num_classes):
        # VPU product in f32, tanh in bf16 (EUP); result feeds the MXU in bf16.
        tT = jnp.tanh((hT * wdT[:, c:c + 1]).astype(jnp.bfloat16))   # (d1, tl)
        yT = jnp.dot(w3, tT, preferred_element_type=jnp.float32) + b3_b  # (d2, tl) f32
        out_ref[0, c, :, :] = yT.astype(out_ref.dtype)


def _largest_divisor_leq(n, cap):
    """Largest divisor of n that is <= cap (cap >= 1)."""
    best = 1
    for k in range(1, n + 1):
        if k > cap:
            break
        if n % k == 0:
            best = k
    return best


def _pick_tile_l(L_pad, B, S, C, d2, x_bytes, out_bytes, weight_bytes,
                 requested=None, vmem_budget=_VMEM_BUDGET_BYTES):
    assert L_pad % 128 == 0
    n = L_pad // 128
    if requested is not None:
        assert requested % 128 == 0 and L_pad % requested == 0, \
            "tile_l must be a multiple of 128 that divides the padded L"
        return requested
    # Double-buffered x block + out block per lane of tile, plus (conservatively
    # double-buffered) weights.
    per_lane = 2 * (S * x_bytes + C * d2 * out_bytes)
    cap = max((vmem_budget - weight_bytes) // (per_lane * 128), 1)
    cap = min(cap, _MAX_TILE_L // 128)
    k = _largest_divisor_leq(n, cap)
    # v7x has 2 TensorCores: make sure the grid has >= 2 steps when possible.
    if B * (n // k) < 2 and n >= 2:
        k = _largest_divisor_leq(n, max(n // 2, 1))
    return 128 * k


def _build_pallas_call(B, C, S, d1, d2, L_pad, tl, out_dtype, vmem_limit,
                       weight_buffers):
    def wspec(shape):
        if weight_buffers == 1:
            # Constant-index blocks: single pipeline buffer (pure VMEM reclaim).
            return pl.BlockSpec(shape, lambda b, l: (0,) * len(shape),
                                pipeline_mode=pl.Buffered(1))
        return pl.BlockSpec(shape, lambda b, l: (0,) * len(shape))

    return pl.pallas_call(
        decoupling_kernel,
        out_shape=jax.ShapeDtypeStruct((B, C, d2, L_pad), out_dtype),
        grid_spec=pl.GridSpec(
            grid=(B, L_pad // tl),
            in_specs=[
                pl.BlockSpec((1, S, tl), lambda b, l: (b, 0, l)),   # feature_map
                wspec((d1, S)),                                     # W1 (bf16)
                wspec((d1, C)),                                     # fc_2(word)^T
                wspec((d2, d1)),                                    # W3 (bf16)
                wspec((d2, 1)),                                     # b3
            ],
            out_specs=pl.BlockSpec((1, C, d2, tl), lambda b, l: (b, 0, 0, l)),
        ),
        compiler_params=pltpu.CompilerParams(
            dimension_semantics=("parallel", "parallel"),
            vmem_limit_bytes=vmem_limit),
    )


def decoupling_forward(feature_map, word_features, params, *, tile_l=None,
                       out_dtype=None, single_buffer_weights=True):
    """Pallas forward of Decoupling.

    feature_map may be f32 or bf16 (bf16 halves the dominant input DMA when S
    is large; do NOT pre-cast in a wrapper — pass it in bf16 directly).
    out_dtype=jnp.bfloat16 halves the dominant output HBM traffic if downstream
    consumers tolerate it (default keeps the input dtype / PyTorch semantics).
    """
    B, S, L = feature_map.shape
    word = word_features[0]                                   # (C, LF)
    C = word.shape[0]
    w1, w2, w3, b3 = params["w1"], params["w2"], params["w3"], params["b3"]
    d1, d2 = w1.shape[0], w3.shape[0]
    out_dtype = feature_map.dtype if out_dtype is None else out_dtype

    # Lane-dense stores: pad L up to a multiple of 128 and slice the pad off
    # afterwards (masked vst.msk partial stores are the biggest measured lever).
    L_pad = -(-L // 128) * 128
    x = feature_map if L_pad == L else jnp.pad(
        feature_map, ((0, 0), (0, 0), (0, L_pad - L)))

    # fc_2 is identical for every tile: compute once here (tiny matmul) and
    # pass it transposed so the kernel slices a (d1, 1) column per class.
    wdT = jnp.dot(w2, word.T).astype(jnp.float32)             # (d1, C)
    # Pre-cast MXU weights to bf16 (halves their DMA bytes / VMEM footprint).
    w1_b = w1.astype(jnp.bfloat16)                            # (d1, S)
    w3_b = w3.astype(jnp.bfloat16)                            # (d2, d1)
    b3_2d = b3.reshape(d2, 1).astype(jnp.float32)             # (d2, 1)

    # VMEM-budgeted tile selection + explicit vmem limit.
    x_bytes = jnp.dtype(x.dtype).itemsize
    out_bytes = jnp.dtype(out_dtype).itemsize
    weight_bytes = 2 * (w1_b.size * 2 + w3_b.size * 2 + wdT.size * 4 + d2 * 4)
    tl = _pick_tile_l(L_pad, B, S, C, d2, x_bytes, out_bytes, weight_bytes,
                      requested=tile_l)
    step_bytes = 2 * (S * x_bytes + C * d2 * out_bytes) * tl + weight_bytes
    vmem_limit = int(min(56 << 20, max(step_bytes + (8 << 20), 32 << 20)))

    args = (x, w1_b, wdT, w3_b, b3_2d)
    try:
        out = _build_pallas_call(
            B, C, S, d1, d2, L_pad, tl, out_dtype, vmem_limit,
            weight_buffers=1 if single_buffer_weights else 2)(*args)
    except Exception:
        if not single_buffer_weights:
            raise
        # Fallback for jax versions that reject pl.Buffered(1) on input specs.
        out = _build_pallas_call(
            B, C, S, d1, d2, L_pad, tl, out_dtype, vmem_limit,
            weight_buffers=2)(*args)

    return out if L_pad == L else out[..., :L]


def decoupling_ref(feature_map, word_features, params, *, mxu_bf16=True):
    """Pure-JAX reference mirroring the PyTorch forward.

    With mxu_bf16=True the matmul operands (and the tanh input) are cast to
    bf16 with f32 accumulation exactly like the kernel, so it can be compared
    at a tight tolerance.
    """
    B, S, L = feature_map.shape
    word = word_features[0]
    C = word.shape[0]
    w1, w2, w3, b3 = params["w1"], params["w2"], params["w3"], params["b3"]
    d1 = w1.shape[0]
    cast = (lambda a: a.astype(jnp.bfloat16)) if mxu_bf16 else (lambda a: a)

    x = jnp.transpose(feature_map, (0, 2, 1)).reshape(B * L, S)
    h = jnp.dot(cast(x), cast(w1.T), preferred_element_type=jnp.float32)
    wd = jnp.dot(word, w2.T)                                   # f32, like the wrapper
    prod = h[:, None, :] * wd[None, :, :]                      # (BL, C, d1) f32
    t = jnp.tanh(cast(prod)) if mxu_bf16 else jnp.tanh(prod)
    y = jnp.dot(cast(t.reshape(-1, d1)), cast(w3.T),
                preferred_element_type=jnp.float32) + b3       # (BL*C, d2)
    y = y.reshape(B, L, C, -1)
    return jnp.transpose(y, (0, 2, 3, 1))                      # (B, C, d2, L)


if __name__ == "__main__":
    # Module hyper-parameters (small but consistent with the forward pass).
    B = 2
    num_classes = 4
    seq_feature_dim = 8        # "channel" of the feature map
    label_feature_dim = 16
    L = 16                     # "location"
    d1, d2 = 128, 128

    key = jax.random.PRNGKey(0)
    k_fm, k_wf, k1, k2, k3, kb = jax.random.split(key, 6)

    feature_map = jax.random.normal(k_fm, (B, seq_feature_dim, L), jnp.float32)
    word_features = jax.random.normal(
        k_wf, (1, num_classes, label_feature_dim), jnp.float32)

    # Parameters stored in PyTorch layout: W1 (d1,S), W2 (d1,LF), W3 (d2,d1), b3 (d2,)
    params = {
        "w1": 0.1 * jax.random.normal(k1, (d1, seq_feature_dim), jnp.float32),
        "w2": 0.1 * jax.random.normal(k2, (d1, label_feature_dim), jnp.float32),
        "w3": 0.1 * jax.random.normal(k3, (d2, d1), jnp.float32),
        "b3": 0.1 * jax.random.normal(kb, (d2,), jnp.float32),
    }

    out = jax.block_until_ready(
        decoupling_forward(feature_map, word_features, params))
    assert out.shape == (B, num_classes, d2, L), out.shape

    # Tight check against a reference that mirrors the kernel's bf16 MXU/tanh casts.
    ref_bf16 = decoupling_ref(feature_map, word_features, params, mxu_bf16=True)
    assert jnp.allclose(out, ref_bf16, atol=2e-3, rtol=2e-3), \
        "mismatch vs bf16 reference"

    # Sanity check against the pure-f32 PyTorch-semantics reference
    # (tolerance reflects the deliberate bf16 cast of the MXU/tanh operands).
    ref_f32 = decoupling_ref(feature_map, word_features, params, mxu_bf16=False)
    assert jnp.allclose(out, ref_f32, atol=3e-2, rtol=3e-2), \
        "mismatch vs f32 reference"

    print("KERNEL_OK")
</pallas_src>

<mosaic_0001>
module attributes {stable_mosaic.version = 11 : i64} {
  func.func @decoupling_kernel(%arg0: i32, %arg1: i32, %arg2: memref<1x8x128xf32, #tpu.memory_space<vmem>>, %arg3: memref<128x8xbf16, #tpu.memory_space<vmem>>, %arg4: memref<128x4xf32, #tpu.memory_space<vmem>>, %arg5: memref<128x128xbf16, #tpu.memory_space<vmem>>, %arg6: memref<128x1xf32, #tpu.memory_space<vmem>>, %arg7: memref<1x4x128x128xf32, #tpu.memory_space<vmem>>) attributes {dimension_semantics = [#tpu.dimension_semantics<parallel>, #tpu.dimension_semantics<parallel>], iteration_bounds = array<i64: 2, 1>, scalar_prefetch = 0 : i64, scratch_operands = 0 : i64, tpu.core_type = #tpu.core_type<tc>, window_params = [{transform_indices = @transform_0, window_bounds = array<i64: 1, 8, 128>}, {pipeline_mode = #tpu.pipeline_mode<synchronous>, transform_indices = @transform_1, window_bounds = array<i64: 128, 8>}, {pipeline_mode = #tpu.pipeline_mode<synchronous>, transform_indices = @transform_2, window_bounds = array<i64: 128, 4>}, {pipeline_mode = #tpu.pipeline_mode<synchronous>, transform_indices = @transform_3, window_bounds = array<i64: 128, 128>}, {pipeline_mode = #tpu.pipeline_mode<synchronous>, transform_indices = @transform_4, window_bounds = array<i64: 128, 1>}, {transform_indices = @transform_5, window_bounds = array<i64: 1, 4, 128, 128>}]} {
    %c0 = arith.constant 0 : index
    %c0_0 = arith.constant 0 : index
    %c0_1 = arith.constant 0 : index
    %0 = vector.load %arg2[%c0, %c0_0, %c0_1] : memref<1x8x128xf32, #tpu.memory_space<vmem>>, vector<1x8x128xf32>
    %1 = vector.shape_cast %0 : vector<1x8x128xf32> to vector<8x128xf32>
    %2 = arith.truncf %1 : vector<8x128xf32> to vector<8x128xbf16>
    %c0_2 = arith.constant 0 : index
    %c0_3 = arith.constant 0 : index
    %3 = vector.load %arg3[%c0_2, %c0_3] : memref<128x8xbf16, #tpu.memory_space<vmem>>, vector<128x8xbf16>
    %cst = arith.constant dense<0.000000e+00> : vector<128x128xf32>
    %4 = tpu.matmul %3, %2, %cst {dimension_numbers = #tpu.dot_dimension_numbers<[1], [0], [0], [1], [0, 0, 1, 1], [], []>} : vector<128x8xbf16>, vector<8x128xbf16>, vector<128x128xf32> -> vector<128x128xf32>
    %c0_4 = arith.constant 0 : index
    %c0_5 = arith.constant 0 : index
    %5 = vector.load %arg5[%c0_4, %c0_5] : memref<128x128xbf16, #tpu.memory_space<vmem>>, vector<128x128xbf16>
    %c0_6 = arith.constant 0 : index
    %c0_7 = arith.constant 0 : index
    %6 = vector.load %arg4[%c0_6, %c0_7] : memref<128x4xf32, #tpu.memory_space<vmem>>, vector<128x4xf32>
    %c0_8 = arith.constant 0 : index
    %c0_9 = arith.constant 0 : index
    %7 = vector.load %arg6[%c0_8, %c0_9] : memref<128x1xf32, #tpu.memory_space<vmem>>, vector<128x1xf32>
    %8 = vector.shape_cast %7 : vector<128x1xf32> to vector<128x1xf32>
    %9 = vector.broadcast %8 : vector<128x1xf32> to vector<128x128xf32>
    %10 = vector.extract_strided_slice %6 {offsets = [0, 0], sizes = [128, 1], strides = [1, 1]} : vector<128x4xf32> to vector<128x1xf32>
    %11 = vector.broadcast %10 : vector<128x1xf32> to vector<128x128xf32>
    %12 = arith.mulf %4, %11 : vector<128x128xf32>
    %13 = arith.truncf %12 : vector<128x128xf32> to vector<128x128xbf16>
    %14 = math.tanh %13 : vector<128x128xbf16>
    %cst_10 = arith.constant dense<0.000000e+00> : vector<128x128xf32>
    %15 = tpu.matmul %5, %14, %cst_10 {dimension_numbers = #tpu.dot_dimension_numbers<[1], [0], [0], [1], [0, 0, 1, 1], [], []>} : vector<128x128xbf16>, vector<128x128xbf16>, vector<128x128xf32> -> vector<128x128xf32>
    %16 = arith.addf %15, %9 : vector<128x128xf32>
    %c0_11 = arith.constant 0 : index
    %c0_12 = arith.constant 0 : index
    %c0_13 = arith.constant 0 : index
    %c0_14 = arith.constant 0 : index
    %17 = vector.load %arg7[%c0_11, %c0_12, %c0_13, %c0_14] : memref<1x4x128x128xf32, #tpu.memory_space<vmem>>, vector<1x1x128x128xf32>
    %18 = vector.shape_cast %17 : vector<1x1x128x128xf32> to vector<128x128xf32>
    %19 = vector.shape_cast %16 : vector<128x128xf32> to vector<1x1x128x128xf32>
    tpu.vector_store %arg7[%c0_11, %c0_12, %c0_13, %c0_14], %19 {strides = array<i32>} : memref<1x4x128x128xf32, #tpu.memory_space<vmem>>, vector<1x1x128x128xf32>,
    %20 = vector.extract_strided_slice %6 {offsets = [0, 1], sizes = [128, 1], strides = [1, 1]} : vector<128x4xf32> to vector<128x1xf32>
    %21 = vector.broadcast %20 : vector<128x1xf32> to vector<128x128xf32>
    %22 = arith.mulf %4, %21 : vector<128x128xf32>
    %23 = arith.truncf %22 : vector<128x128xf32> to vector<128x128xbf16>
    %24 = math.tanh %23 : vector<128x128xbf16>
    %cst_15 = arith.constant dense<0.000000e+00> : vector<128x128xf32>
    %25 = tpu.matmul %5, %24, %cst_15 {dimension_numbers = #tpu.dot_dimension_numbers<[1], [0], [0], [1], [0, 0, 1, 1], [], []>} : vector<128x128xbf16>, vector<128x128xbf16>, vector<128x128xf32> -> vector<128x128xf32>
    %26 = arith.addf %25, %9 : vector<128x128xf32>
    %c0_16 = arith.constant 0 : index
    %c1 = arith.constant 1 : index
    %c0_17 = arith.constant 0 : index
    %c0_18 = arith.constant 0 : index
    %27 = vector.load %arg7[%c0_16, %c1, %c0_17, %c0_18] : memref<1x4x128x128xf32, #tpu.memory_space<vmem>>, vector<1x1x128x128xf32>
    %28 = vector.shape_cast %27 : vector<1x1x128x128xf32> to vector<128x128xf32>
    %29 = vector.shape_cast %26 : vector<128x128xf32> to vector<1x1x128x128xf32>
    tpu.vector_store %arg7[%c0_16, %c1, %c0_17, %c0_18], %29 {strides = array<i32>} : memref<1x4x128x128xf32, #tpu.memory_space<vmem>>, vector<1x1x128x128xf32>,
    %30 = vector.extract_strided_slice %6 {offsets = [0, 2], sizes = [128, 1], strides = [1, 1]} : vector<128x4xf32> to vector<128x1xf32>
    %31 = vector.broadcast %30 : vector<128x1xf32> to vector<128x128xf32>
    %32 = arith.mulf %4, %31 : vector<128x128xf32>
    %33 = arith.truncf %32 : vector<128x128xf32> to vector<128x128xbf16>
    %34 = math.tanh %33 : vector<128x128xbf16>
    %cst_19 = arith.constant dense<0.000000e+00> : vector<128x128xf32>
    %35 = tpu.matmul %5, %34, %cst_19 {dimension_numbers = #tpu.dot_dimension_numbers<[1], [0], [0], [1], [0, 0, 1, 1], [], []>} : vector<128x128xbf16>, vector<128x128xbf16>, vector<128x128xf32> -> vector<128x128xf32>
    %36 = arith.addf %35, %9 : vector<128x128xf32>
    %c0_20 = arith.constant 0 : index
    %c2 = arith.constant 2 : index
    %c0_21 = arith.constant 0 : index
    %c0_22 = arith.constant 0 : index
    %37 = vector.load %arg7[%c0_20, %c2, %c0_21, %c0_22] : memref<1x4x128x128xf32, #tpu.memory_space<vmem>>, vector<1x1x128x128xf32>
    %38 = vector.shape_cast %37 : vector<1x1x128x128xf32> to vector<128x128xf32>
    %39 = vector.shape_cast %36 : vector<128x128xf32> to vector<1x1x128x128xf32>
    tpu.vector_store %arg7[%c0_20, %c2, %c0_21, %c0_22], %39 {strides = array<i32>} : memref<1x4x128x128xf32, #tpu.memory_space<vmem>>, vector<1x1x128x128xf32>,
    %40 = vector.extract_strided_slice %6 {offsets = [0, 3], sizes = [128, 1], strides = [1, 1]} : vector<128x4xf32> to vector<128x1xf32>
    %41 = vector.broadcast %40 : vector<128x1xf32> to vector<128x128xf32>
    %42 = arith.mulf %4, %41 : vector<128x128xf32>
    %43 = arith.truncf %42 : vector<128x128xf32> to vector<128x128xbf16>
    %44 = math.tanh %43 : vector<128x128xbf16>
    %cst_23 = arith.constant dense<0.000000e+00> : vector<128x128xf32>
    %45 = tpu.matmul %5, %44, %cst_23 {dimension_numbers = #tpu.dot_dimension_numbers<[1], [0], [0], [1], [0, 0, 1, 1], [], []>} : vector<128x128xbf16>, vector<128x128xbf16>, vector<128x128xf32> -> vector<128x128xf32>
    %46 = arith.addf %45, %9 : vector<128x128xf32>
    %c0_24 = arith.constant 0 : index
    %c3 = arith.constant 3 : index
    %c0_25 = arith.constant 0 : index
    %c0_26 = arith.constant 0 : index
    %47 = vector.load %arg7[%c0_24, %c3, %c0_25, %c0_26] : memref<1x4x128x128xf32, #tpu.memory_space<vmem>>, vector<1x1x128x128xf32>
    %48 = vector.shape_cast %47 : vector<1x1x128x128xf32> to vector<128x128xf32>
    %49 = vector.shape_cast %46 : vector<128x128xf32> to vector<1x1x128x128xf32>
    tpu.vector_store %arg7[%c0_24, %c3, %c0_25, %c0_26], %49 {strides = array<i32>} : memref<1x4x128x128xf32, #tpu.memory_space<vmem>>, vector<1x1x128x128xf32>,
    return
  }
  func.func @transform_0(%arg0: i32, %arg1: i32) -> (i32, i32, i32) {
    %c0_i32 = arith.constant 0 : i32
    %c0_i32_0 = arith.constant 0 : i32
    return %arg0, %c0_i32, %arg1 : i32, i32, i32
  }
  func.func @transform_1(%arg0: i32, %arg1: i32) -> (i32, i32) {
    %c0_i32 = arith.constant 0 : i32
    %c0_i32_0 = arith.constant 0 : i32
    %c0_i32_1 = arith.constant 0 : i32
    return %c0_i32, %c0_i32_0 : i32, i32
  }
  func.func @transform_2(%arg0: i32, %arg1: i32) -> (i32, i32) {
    %c0_i32 = arith.constant 0 : i32
    %c0_i32_0 = arith.constant 0 : i32
    %c0_i32_1 = arith.constant 0 : i32
    return %c0_i32, %c0_i32_0 : i32, i32
  }
  func.func @transform_3(%arg0: i32, %arg1: i32) -> (i32, i32) {
    %c0_i32 = arith.constant 0 : i32
    %c0_i32_0 = arith.constant 0 : i32
    %c0_i32_1 = arith.constant 0 : i32
    return %c0_i32, %c0_i32_0 : i32, i32
  }
  func.func @transform_4(%arg0: i32, %arg1: i32) -> (i32, i32) {
    %c0_i32 = arith.constant 0 : i32
    %c0_i32_0 = arith.constant 0 : i32
    %c0_i32_1 = arith.constant 0 : i32
    return %c0_i32, %c0_i32_0 : i32, i32
  }
  func.func @transform_5(%arg0: i32, %arg1: i32) -> (i32, i32, i32, i32) {
    %c0_i32 = arith.constant 0 : i32
    %c0_i32_0 = arith.constant 0 : i32
    %c0_i32_1 = arith.constant 0 : i32
    return %arg0, %c0_i32, %c0_i32_0, %arg1 : i32, i32, i32, i32
  }
}

module attributes {stable_mosaic.version = 11 : i64} {
  func.func @decoupling_kernel(%arg0: i32, %arg1: i32, %arg2: memref<1x8x128xf32, #tpu.memory_space<vmem>>, %arg3: memref<128x8xbf16, #tpu.memory_space<vmem>>, %arg4: memref<128x4xf32, #tpu.memory_space<vmem>>, %arg5: memref<128x128xbf16, #tpu.memory_space<vmem>>, %arg6: memref<128x1xf32, #tpu.memory_space<vmem>>, %arg7: memref<1x4x128x128xf32, #tpu.memory_space<vmem>>) attributes {dimension_semantics = [#tpu.dimension_semantics<parallel>, #tpu.dimension_semantics<parallel>], iteration_bounds = array<i64: 2, 1>, scalar_prefetch = 0 : i64, scratch_operands = 0 : i64, tpu.core_type = #tpu.core_type<tc>, window_params = [{transform_indices = @transform_0, window_bounds = array<i64: 1, 8, 128>}, {pipeline_mode = #tpu.pipeline_mode<synchronous>, transform_indices = @transform_1, window_bounds = array<i64: 128, 8>}, {pipeline_mode = #tpu.pipeline_mode<synchronous>, transform_indices = @transform_2, window_bounds = array<i64: 128, 4>}, {pipeline_mode = #tpu.pipeline_mode<synchronous>, transform_indices = @transform_3, window_bounds = array<i64: 128, 128>}, {pipeline_mode = #tpu.pipeline_mode<synchronous>, transform_indices = @transform_4, window_bounds = array<i64: 128, 1>}, {transform_indices = @transform_5, window_bounds = array<i64: 1, 4, 128, 128>}]} {
    %c0 = arith.constant 0 : index
    %c0_0 = arith.constant 0 : index
    %c0_1 = arith.constant 0 : index
    %0 = vector.load %arg2[%c0, %c0_0, %c0_1] : memref<1x8x128xf32, #tpu.memory_space<vmem>>, vector<1x8x128xf32>
    %1 = vector.shape_cast %0 : vector<1x8x128xf32> to vector<8x128xf32>
    %2 = arith.truncf %1 : vector<8x128xf32> to vector<8x128xbf16>
    %c0_2 = arith.constant 0 : index
    %c0_3 = arith.constant 0 : index
    %3 = vector.load %arg3[%c0_2, %c0_3] : memref<128x8xbf16, #tpu.memory_space<vmem>>, vector<128x8xbf16>
    %cst = arith.constant dense<0.000000e+00> : vector<128x128xf32>
    %4 = tpu.matmul %3, %2, %cst {dimension_numbers = #tpu.dot_dimension_numbers<[1], [0], [0], [1], [0, 0, 1, 1], [], []>} : vector<128x8xbf16>, vector<8x128xbf16>, vector<128x128xf32> -> vector<128x128xf32>
    %c0_4 = arith.constant 0 : index
    %c0_5 = arith.constant 0 : index
    %5 = vector.load %arg5[%c0_4, %c0_5] : memref<128x128xbf16, #tpu.memory_space<vmem>>, vector<128x128xbf16>
    %c0_6 = arith.constant 0 : index
    %c0_7 = arith.constant 0 : index
    %6 = vector.load %arg4[%c0_6, %c0_7] : memref<128x4xf32, #tpu.memory_space<vmem>>, vector<128x4xf32>
    %c0_8 = arith.constant 0 : index
    %c0_9 = arith.constant 0 : index
    %7 = vector.load %arg6[%c0_8, %c0_9] : memref<128x1xf32, #tpu.memory_space<vmem>>, vector<128x1xf32>
    %8 = vector.shape_cast %7 : vector<128x1xf32> to vector<128x1xf32>
    %9 = vector.broadcast %8 : vector<128x1xf32> to vector<128x128xf32>
    %10 = vector.extract_strided_slice %6 {offsets = [0, 0], sizes = [128, 1], strides = [1, 1]} : vector<128x4xf32> to vector<128x1xf32>
    %11 = vector.broadcast %10 : vector<128x1xf32> to vector<128x128xf32>
    %12 = arith.mulf %4, %11 : vector<128x128xf32>
    %13 = arith.truncf %12 : vector<128x128xf32> to vector<128x128xbf16>
    %14 = math.tanh %13 : vector<128x128xbf16>
    %cst_10 = arith.constant dense<0.000000e+00> : vector<128x128xf32>
    %15 = tpu.matmul %5, %14, %cst_10 {dimension_numbers = #tpu.dot_dimension_numbers<[1], [0], [0], [1], [0, 0, 1, 1], [], []>} : vector<128x128xbf16>, vector<128x128xbf16>, vector<128x128xf32> -> vector<128x128xf32>
    %16 = arith.addf %15, %9 : vector<128x128xf32>
    %c0_11 = arith.constant 0 : index
    %c0_12 = arith.constant 0 : index
    %c0_13 = arith.constant 0 : index
    %c0_14 = arith.constant 0 : index
    %17 = vector.load %arg7[%c0_11, %c0_12, %c0_13, %c0_14] : memref<1x4x128x128xf32, #tpu.memory_space<vmem>>, vector<1x1x128x128xf32>
    %18 = vector.shape_cast %17 : vector<1x1x128x128xf32> to vector<128x128xf32>
    %19 = vector.shape_cast %16 : vector<128x128xf32> to vector<1x1x128x128xf32>
    tpu.vector_store %arg7[%c0_11, %c0_12, %c0_13, %c0_14], %19 {strides = array<i32>} : memref<1x4x128x128xf32, #tpu.memory_space<vmem>>, vector<1x1x128x128xf32>,
    %20 = vector.extract_strided_slice %6 {offsets = [0, 1], sizes = [128, 1], strides = [1, 1]} : vector<128x4xf32> to vector<128x1xf32>
    %21 = vector.broadcast %20 : vector<128x1xf32> to vector<128x128xf32>
    %22 = arith.mulf %4, %21 : vector<128x128xf32>
    %23 = arith.truncf %22 : vector<128x128xf32> to vector<128x128xbf16>
    %24 = math.tanh %23 : vector<128x128xbf16>
    %cst_15 = arith.constant dense<0.000000e+00> : vector<128x128xf32>
    %25 = tpu.matmul %5, %24, %cst_15 {dimension_numbers = #tpu.dot_dimension_numbers<[1], [0], [0], [1], [0, 0, 1, 1], [], []>} : vector<128x128xbf16>, vector<128x128xbf16>, vector<128x128xf32> -> vector<128x128xf32>
    %26 = arith.addf %25, %9 : vector<128x128xf32>
    %c0_16 = arith.constant 0 : index
    %c1 = arith.constant 1 : index
    %c0_17 = arith.constant 0 : index
    %c0_18 = arith.constant 0 : index
    %27 = vector.load %arg7[%c0_16, %c1, %c0_17, %c0_18] : memref<1x4x128x128xf32, #tpu.memory_space<vmem>>, vector<1x1x128x128xf32>
    %28 = vector.shape_cast %27 : vector<1x1x128x128xf32> to vector<128x128xf32>
    %29 = vector.shape_cast %26 : vector<128x128xf32> to vector<1x1x128x128xf32>
    tpu.vector_store %arg7[%c0_16, %c1, %c0_17, %c0_18], %29 {strides = array<i32>} : memref<1x4x128x128xf32, #tpu.memory_space<vmem>>, vector<1x1x128x128xf32>,
    %30 = vector.extract_strided_slice %6 {offsets = [0, 2], sizes = [128, 1], strides = [1, 1]} : vector<128x4xf32> to vector<128x1xf32>
    %31 = vector.broadcast %30 : vector<128x1xf32> to vector<128x128xf32>
    %32 = arith.mulf %4, %31 : vector<128x128xf32>
    %33 = arith.truncf %32 : vector<128x128xf32> to vector<128x128xbf16>
    %34 = math.tanh %33 : vector<128x128xbf16>
    %cst_19 = arith.constant dense<0.000000e+00> : vector<128x128xf32>
    %35 = tpu.matmul %5, %34, %cst_19 {dimension_numbers = #tpu.dot_dimension_numbers<[1], [0], [0], [1], [0, 0, 1, 1], [], []>} : vector<128x128xbf16>, vector<128x128xbf16>, vector<128x128xf32> -> vector<128x128xf32>
    %36 = arith.addf %35, %9 : vector<128x128xf32>
    %c0_20 = arith.constant 0 : index
    %c2 = arith.constant 2 : index
    %c0_21 = arith.constant 0 : index
    %c0_22 = arith.constant 0 : index
    %37 = vector.load %arg7[%c0_20, %c2, %c0_21, %c0_22] : memref<1x4x128x128xf32, #tpu.memory_space<vmem>>, vector<1x1x128x128xf32>
    %38 = vector.shape_cast %37 : vector<1x1x128x128xf32> to vector<128x128xf32>
    %39 = vector.shape_cast %36 : vector<128x128xf32> to vector<1x1x128x128xf32>
    tpu.vector_store %arg7[%c0_20, %c2, %c0_21, %c0_22], %39 {strides = array<i32>} : memref<1x4x128x128xf32, #tpu.memory_space<vmem>>, vector<1x1x128x128xf32>,
    %40 = vector.extract_strided_slice %6 {offsets = [0, 3], sizes = [128, 1], strides = [1, 1]} : vector<128x4xf32> to vector<128x1xf32>
    %41 = vector.broadcast %40 : vector<128x1xf32> to vector<128x128xf32>
    %42 = arith.mulf %4, %41 : vector<128x128xf32>
    %43 = arith.truncf %42 : vector<128x128xf32> to vector<128x128xbf16>
    %44 = math.tanh %43 : vector<128x128xbf16>
    %cst_23 = arith.constant dense<0.000000e+00> : vector<128x128xf32>
    %45 = tpu.matmul %5, %44, %cst_23 {dimension_numbers = #tpu.dot_dimension_numbers<[1], [0], [0], [1], [0, 0, 1, 1], [], []>} : vector<128x128xbf16>, vector<128x128xbf16>, vector<128x128xf32> -> vector<128x128xf32>
    %46 = arith.addf %45, %9 : vector<128x128xf32>
    %c0_24 = arith.constant 0 : index
    %c3 = arith.constant 3 : index
    %c0_25 = arith.constant 0 : index
    %c0_26 = arith.constant 0 : index
    %47 = vector.load %arg7[%c0_24, %c3, %c0_25, %c0_26] : memref<1x4x128x128xf32, #tpu.memory_space<vmem>>, vector<1x1x128x128xf32>
    %48 = vector.shape_cast %47 : vector<1x1x128x128xf32> to vector<128x128xf32>
    %49 = vector.shape_cast %46 : vector<128x128xf32> to vector<1x1x128x128xf32>
    tpu.vector_store %arg7[%c0_24, %c3, %c0_25, %c0_26], %49 {strides = array<i32>} : memref<1x4x128x128xf32, #tpu.memory_space<vmem>>, vector<1x1x128x128xf32>,
    return
  }
  func.func @transform_0(%arg0: i32, %arg1: i32) -> (i32, i32, i32) {
    %c0_i32 = arith.constant 0 : i32
    %c0_i32_0 = arith.constant 0 : i32
    return %arg0, %c0_i32, %arg1 : i32, i32, i32
  }
  func.func @transform_1(%arg0: i32, %arg1: i32) -> (i32, i32) {
    %c0_i32 = arith.constant 0 : i32
    %c0_i32_0 = arith.constant 0 : i32
    %c0_i32_1 = arith.constant 0 : i32
    return %c0_i32, %c0_i32_0 : i32, i32
  }
  func.func @transform_2(%arg0: i32, %arg1: i32) -> (i32, i32) {
    %c0_i32 = arith.constant 0 : i32
    %c0_i32_0 = arith.constant 0 : i32
    %c0_i32_1 = arith.constant 0 : i32
    return %c0_i32, %c0_i32_0 : i32, i32
  }
  func.func @transform_3(%arg0: i32, %arg1: i32) -> (i32, i32) {
    %c0_i32 = arith.constant 0 : i32
    %c0_i32_0 = arith.constant 0 : i32
    %c0_i32_1 = arith.constant 0 : i32
    return %c0_i32, %c0_i32_0 : i32, i32
  }
  func.func @transform_4(%arg0: i32, %arg1: i32) -> (i32, i32) {
    %c0_i32 = arith.constant 0 : i32
    %c0_i32_0 = arith.constant 0 : i32
    %c0_i32_1 = arith.constant 0 : i32
    return %c0_i32, %c0_i32_0 : i32, i32
  }
  func.func @transform_5(%arg0: i32, %arg1: i32) -> (i32, i32, i32, i32) {
    %c0_i32 = arith.constant 0 : i32
    %c0_i32_0 = arith.constant 0 : i32
    %c0_i32_1 = arith.constant 0 : i32
    return %arg0, %c0_i32, %c0_i32_0, %arg1 : i32, i32, i32, i32
  }
}

</mosaic_0001>

<llo_original>
// kernel: tpu_custom_call.1
$region0: #{tpu_custom_call.1}
  #allocation0 [shape = 'u32[]', space=smem, size = 0x4, offset = 0x4, fixed_abs, tag = 'smem constant byte address 0x4 - core index']
  #allocation1 [shape = 'u32[144,128]{1,0:T(1,128)}', space=vmem, size = 0x12000, scoped, tag = 'internal scratch']
  %s0 = inlined_call_operand.vmem [shape: f32[2,8,128], index: 0, kind: input, shape index: {}]
  %s1 = inlined_call_operand.vmem [shape: bf16[128,8], index: 1, kind: input, shape index: {}]
  %s2 = inlined_call_operand.vmem [shape: f32[128,4], index: 2, kind: input, shape index: {}]
  %s3 = inlined_call_operand.vmem [shape: bf16[128,128], index: 3, kind: input, shape index: {}]
  %s4 = inlined_call_operand.vmem [shape: f32[128,1], index: 4, kind: input, shape index: {}]
  %s5 = inlined_call_operand.hbm [shape: f32[2,4,128,128], index: 5, kind: output, shape index: {}]
  %s6 = sld [smem:[#allocation0]]
  $region53: #{tpu_custom_call.1} parent=0
    _
  %s8 = ssub.s32 1, %s6
  %s9 = scalar_select 0, %s8, %s6
  $region1: #{tpu_custom_call.1} parent=0
    #allocation2 [shape = 'u8[524288]{0}', space=vmem, size = 0x80000, scoped, tag = 'output window, operand 0']
    #allocation3 [shape = 's32[2]{0}', space=sflag, size = 0x8, scoped, tag = 'scoped memory for tpu_custom_call.1']
    %10 = vsyncpa [#allocation3], 0
    %s11 = scalar_lea.sflag [#allocation3], 1
    %12 = vsyncpa %s11, 0
    loop: start=0, step=1, limit=4
    $region2: #{tpu_custom_call.1} parent=1 // loop_pre_header
      _
    $region3: #{tpu_custom_call.1} parent=1 // loop_header
      %s14 = sphi 0, %s18
      %p15 = scmp.ge.s32.totalorder %s14, 4
      %s21 = sphi 0, %s33
      %s22 = sphi 0, %s29
      %s23 = sphi 0, %s21
      %s24 = sphi 0, %s22
      %s25 = sphi 0, %s23
      %s26 = sphi 0, %s24
      %s38 = sphi 0, %s40
      %s41 = sphi 0, %s38
      %s42 = sphi 0, %s41
      %s58 = sphi 0, %s42
      %s62 = sphi 0, %s62
      %s64 = sphi 0, %s62
      %s65 = sphi 0, %s64
      %s79 = sphi 0, %s65
      %s83 = sphi 0, %s83
      %s85 = sphi 0, %s83
      %s86 = sphi 0, %s85
      %s100 = sphi 0, %s86
      %s104 = sphi 0, %s104
      %s106 = sphi 0, %s104
      %s107 = sphi 0, %s106
      %s121 = sphi 0, %s107
      %s125 = sphi 0, %s125
      %s127 = sphi 0, %s125
      %s128 = sphi 0, %s127
      %s142 = sphi 0, %s128
      %s150 = sphi 0, %s152
      %s153 = sphi 0, %s150
      %s154 = sphi 0, %s153
      %s170 = sphi 0, %s154
    $region4: #{tpu_custom_call.1} parent=1 // loop_header_branch
      %17 = sbr.rel (%p15) target = $region8
    $region5: #{tpu_custom_call.1} parent=1 // loop_body
      %s19 = ssub.s32 %s14, 1
      %s20 = ssub.s32 %s14, 2
      %s27 = sadd.s32 1, %s22
      %p28 = scmp.ge.s32.totalorder %s27, 1
      %s29 = scalar_select %p28, 0, %s27
      %s30 = sadd.s32 1, %s21
      %s31 = scalar_select %p28, %s30, %s21
      %p32 = scmp.ge.s32.totalorder %s31, 2
      %s33 = scalar_select %p32, 0, %s31
      %s34 = ssub.s32 %s21, %s33
      %s35 = ssub.s32 %s22, %s29
      %s36 = sor.u32 %s34, %s35
      %p37 = scmp.eq.s32.totalorder %s36, 0
      %s39 = sadd.s32 %s38, 1
      %s40 = scalar_select %p37, %s38, %s39
      %p43 = pneg %p37
      %p44 = scmp.eq.s32.totalorder %s14, 1
      %p45 = por %p43, %p44
      %p46 = scmp.ne.s32.totalorder %s38, %s41
      %p47 = scmp.eq.s32.totalorder %s14, 0
      %p48 = por %p46, %p47
      %p49 = scmp.ne.s32.totalorder %s38, %s41
      %p50 = scmp.eq.s32.totalorder %s19, 1
      %p51 = por %p49, %p50
      %p52 = scmp.ne.s32.totalorder %s41, %s42
      %p53 = scmp.eq.s32.totalorder %s19, 0
      %p54 = por %p52, %p53
      %p55 = scmp.ne.s32.totalorder %s41, %s42
      %p56 = scmp.eq.s32.totalorder %s20, 1
      %p57 = por %p55, %p56
      %p59 = scmp.ne.s32.totalorder %s42, %s58
      %p60 = scmp.eq.s32.totalorder %s20, 0
      %p61 = por %p59, %p60
      %s63 = sadd.s32 %s62, 1
      %p66 = scmp.eq.s32.totalorder %s14, 1
      %p67 = scmp.ne.s32.totalorder %s62, %s64
      %p68 = scmp.eq.s32.totalorder %s14, 0
      %p69 = por %p67, %p68
      %p70 = scmp.ne.s32.totalorder %s62, %s64
      %p71 = scmp.eq.s32.totalorder %s19, 1
      %p72 = por %p70, %p71
      %p73 = scmp.ne.s32.totalorder %s64, %s65
      %p74 = scmp.eq.s32.totalorder %s19, 0
      %p75 = por %p73, %p74
      %p76 = scmp.ne.s32.totalorder %s64, %s65
      %p77 = scmp.eq.s32.totalorder %s20, 1
      %p78 = por %p76, %p77
      %p80 = scmp.ne.s32.totalorder %s65, %s79
      %p81 = scmp.eq.s32.totalorder %s20, 0
      %p82 = por %p80, %p81
      %s84 = sadd.s32 %s83, 1
      %p87 = scmp.eq.s32.totalorder %s14, 1
      %p88 = scmp.ne.s32.totalorder %s83, %s85
      %p89 = scmp.eq.s32.totalorder %s14, 0
      %p90 = por %p88, %p89
      %p91 = scmp.ne.s32.totalorder %s83, %s85
      %p92 = scmp.eq.s32.totalorder %s19, 1
      %p93 = por %p91, %p92
      %p94 = scmp.ne.s32.totalorder %s85, %s86
      %p95 = scmp.eq.s32.totalorder %s19, 0
      %p96 = por %p94, %p95
      %p97 = scmp.ne.s32.totalorder %s85, %s86
      %p98 = scmp.eq.s32.totalorder %s20, 1
      %p99 = por %p97, %p98
      %p101 = scmp.ne.s32.totalorder %s86, %s100
      %p102 = scmp.eq.s32.totalorder %s20, 0
      %p103 = por %p101, %p102
      %s105 = sadd.s32 %s104, 1
      %p108 = scmp.eq.s32.totalorder %s14, 1
      %p109 = scmp.ne.s32.totalorder %s104, %s106
      %p110 = scmp.eq.s32.totalorder %s14, 0
      %p111 = por %p109, %p110
      %p112 = scmp.ne.s32.totalorder %s104, %s106
      %p113 = scmp.eq.s32.totalorder %s19, 1
      %p114 = por %p112, %p113
      %p115 = scmp.ne.s32.totalorder %s106, %s107
      %p116 = scmp.eq.s32.totalorder %s19, 0
      %p117 = por %p115, %p116
      %p118 = scmp.ne.s32.totalorder %s106, %s107
      %p119 = scmp.eq.s32.totalorder %s20, 1
      %p120 = por %p118, %p119
      %p122 = scmp.ne.s32.totalorder %s107, %s121
      %p123 = scmp.eq.s32.totalorder %s20, 0
      %p124 = por %p122, %p123
      %s126 = sadd.s32 %s125, 1
      %p129 = scmp.eq.s32.totalorder %s14, 1
      %p130 = scmp.ne.s32.totalorder %s125, %s127
      %p131 = scmp.eq.s32.totalorder %s14, 0
      %p132 = por %p130, %p131
      %p133 = scmp.ne.s32.totalorder %s125, %s127
      %p134 = scmp.eq.s32.totalorder %s19, 1
      %p135 = por %p133, %p134
      %p136 = scmp.ne.s32.totalorder %s127, %s128
      %p137 = scmp.eq.s32.totalorder %s19, 0
      %p138 = por %p136, %p137
      %p139 = scmp.ne.s32.totalorder %s127, %s128
      %p140 = scmp.eq.s32.totalorder %s20, 1
      %p141 = por %p139, %p140
      %p143 = scmp.ne.s32.totalorder %s128, %s142
      %p144 = scmp.eq.s32.totalorder %s20, 0
      %p145 = por %p143, %p144
      %s146 = ssub.s32 %s21, %s33
      %s147 = ssub.s32 %s22, %s29
      %s148 = sor.u32 %s146, %s147
      %p149 = scmp.eq.s32.totalorder %s148, 0
      %s151 = sadd.s32 %s150, 1
      %s152 = scalar_select %p149, %s150, %s151
      %p155 = pneg %p149
      %p156 = scmp.eq.s32.totalorder %s14, 1
      %p157 = por %p155, %p156
      %p158 = scmp.ne.s32.totalorder %s150, %s153
      %p159 = scmp.eq.s32.totalorder %s14, 0
      %p160 = por %p158, %p159
      %p161 = scmp.ne.s32.totalorder %s150, %s153
      %p162 = scmp.eq.s32.totalorder %s19, 1
      %p163 = por %p161, %p162
      %p164 = scmp.ne.s32.totalorder %s153, %s154
      %p165 = scmp.eq.s32.totalorder %s19, 0
      %p166 = por %p164, %p165
      %p167 = scmp.ne.s32.totalorder %s153, %s154
      %p168 = scmp.eq.s32.totalorder %s20, 1
      %p169 = por %p167, %p168
      %p171 = scmp.ne.s32.totalorder %s154, %s170
      %p172 = scmp.eq.s32.totalorder %s20, 0
      %p173 = por %p171, %p172
      %p174 = scmp.le.s32.totalorder 1, %s14
      %p175 = scmp.lt.s32.totalorder %s14, 3
      %p176 = pnand %p174, %p175
      %p177 = pneg %p176
      // Predicated region
      $region9: #{tpu_custom_call.1} parent=5 // pred_check
        _
      $region10: #{tpu_custom_call.1} parent=5 // pred_check_branch
        %179 = sbr.rel (%p176) target = $region12
      $region11: #{tpu_custom_call.1} parent=5 // pred_region
        %s180 = ssub.s32 %s14, 1
        // Predicated region
        $region13: #{tpu_custom_call.1} parent=11 // pred_check
          %p181 = pneg %p75
        $region14: #{tpu_custom_call.1} parent=11 // pred_check_branch
          %183 = sbr.rel (%p181) target = $region16
        $region15: #{tpu_custom_call.1} parent=11 // pred_region
          _
        $region16: #{tpu_custom_call.1} parent=11 // pred_fallthru
          _
        // Predicated region
        $region17: #{tpu_custom_call.1} parent=11 // pred_check
          %p184 = pneg %p96
        $region18: #{tpu_custom_call.1} parent=11 // pred_check_branch
          %186 = sbr.rel (%p184) target = $region20
        $region19: #{tpu_custom_call.1} parent=11 // pred_region
          _
        $region20: #{tpu_custom_call.1} parent=11 // pred_fallthru
          _
        // Predicated region
        $region21: #{tpu_custom_call.1} parent=11 // pred_check
          %p187 = pneg %p117
        $region22: #{tpu_custom_call.1} parent=11 // pred_check_branch
          %189 = sbr.rel (%p187) target = $region24
        $region23: #{tpu_custom_call.1} parent=11 // pred_region
          _
        $region24: #{tpu_custom_call.1} parent=11 // pred_fallthru
          _
        // Predicated region
        $region25: #{tpu_custom_call.1} parent=11 // pred_check
          %p190 = pneg %p138
        $region26: #{tpu_custom_call.1} parent=11 // pred_check_branch
          %192 = sbr.rel (%p190) target = $region28
        $region27: #{tpu_custom_call.1} parent=11 // pred_region
          _
        $region28: #{tpu_custom_call.1} parent=11 // pred_fallthru
          _
      $region12: #{tpu_custom_call.1} parent=5 // pred_fallthru
        _
      %p193 = scmp.lt.s32.totalorder %s14, 2
      // Predicated region
      $region29: #{tpu_custom_call.1} parent=5 // pred_check
        %p194 = pneg %p193
      $region30: #{tpu_custom_call.1} parent=5 // pred_check_branch
        %196 = sbr.rel (%p194) target = $region32
      $region31: #{tpu_custom_call.1} parent=5 // pred_region
        // Predicated region
        $region33: #{tpu_custom_call.1} parent=31 // pred_check
          %p197 = pneg %p48
        $region34: #{tpu_custom_call.1} parent=31 // pred_check_branch
          %199 = sbr.rel (%p197) target = $region36
        $region35: #{tpu_custom_call.1} parent=31 // pred_region
          %p200 = scmp.lt.s32.totalorder %s21, 1
          %s201 = scalar_select %p200, %s21, 1
          %p202 = scmp.lt.s32.totalorder %s22, 0
          %s203 = scalar_select %p202, %s22, 0
          %s204 = sadd.s32 %s203, %s201
          %s205 = smul.addr %s204, 8
          %s206 = scalar_lea.vmem %s0, %s205
        $region36: #{tpu_custom_call.1} parent=31 // pred_fallthru
          _
      $region32: #{tpu_custom_call.1} parent=5 // pred_fallthru
        _
      %p207 = scmp.le.s32.totalorder 1, %s14
      %p208 = scmp.lt.s32.totalorder %s14, 3
      %p209 = pnand %p207, %p208
      %p210 = pneg %p209
      // Predicated region
      $region37: #{tpu_custom_call.1} parent=5 // pred_check
        _
      $region38: #{tpu_custom_call.1} parent=5 // pred_check_branch
        %212 = sbr.rel (%p209) target = $region40
      $region39: #{tpu_custom_call.1} parent=5 // pred_region
        %s213 = ssub.s32 %s14, 1
        %p214 = scmp.lt.s32.totalorder %s23, 1
        %s215 = scalar_select %p214, %s23, 1
        %p216 = scmp.lt.s32.totalorder %s24, 0
        %s217 = scalar_select %p216, %s24, 0
        %s218 = sadd.s32 %s217, %s215
        %s219 = smul.addr %s218, 8
        %s220 = scalar_lea.vmem %s0, %s219
        %p221 = pneg %p54
        %p222 = pneg %p51
        %p223 = pneg %p75
        %p224 = pneg %p72
        %p225 = pneg %p96
        %p226 = pneg %p93
        %p227 = pneg %p117
        %p228 = pneg %p114
        %p229 = pneg %p138
        %p230 = pneg %p135
        %p231 = pneg %p166
        %p232 = pneg %p163
        %s233 = sand.u32 %s153, 1
        %s234 = scalar_lea.sflag [#allocation3], %s233
        %s235 = sand.u32 %s153, 1
        %s236 = smul.addr %s235, 512
        %s237 = scalar_lea.vmem [#allocation2], %s236
        %p238 = scmp.lt.s32.totalorder %s23, 1
        %s239 = scalar_select %p238, %s23, 1
        %p240 = scmp.lt.s32.totalorder %s24, 0
        %s241 = scalar_select %p240, %s24, 0
        %s242 = sadd.s32 %s241, %s239
        %s243 = smul.addr %s242, 8
        %s244 = scalar_lea.vmem %s0, %s243
        %v246 = vld [vmem:[%s244] sm:$0xff]
        %v247 = vpack.c.bf16 %v246, %v246
        %v248 = vld [vmem:[%s1] sm:$0xf]
        %v249 = vld [vmem:[%s1 + $0x4] sm:$0xf]
        %v250 = vld [vmem:[%s1 + $0x8] sm:$0xf]
        %v251 = vld [vmem:[%s1 + $0xc] sm:$0xf]
        %v252 = vld [vmem:[%s1 + $0x10] sm:$0xf]
        %v253 = vld [vmem:[%s1 + $0x14] sm:$0xf]
        %v254 = vld [vmem:[%s1 + $0x18] sm:$0xf]
        %v255 = vld [vmem:[%s1 + $0x1c] sm:$0xf]
        %v256 = vld [vmem:[%s1 + $0x20] sm:$0xf]
        %v257 = vld [vmem:[%s1 + $0x24] sm:$0xf]
        %v258 = vld [vmem:[%s1 + $0x28] sm:$0xf]
        %v259 = vld [vmem:[%s1 + $0x2c] sm:$0xf]
        %v260 = vld [vmem:[%s1 + $0x30] sm:$0xf]
        %v261 = vld [vmem:[%s1 + $0x34] sm:$0xf]
        %v262 = vld [vmem:[%s1 + $0x38] sm:$0xf]
        %v263 = vld [vmem:[%s1 + $0x3c] sm:$0xf]
        %v280 = vunpack.c.l.b16 %v248
        %v281 = vunpack.c.l.b16 %v249
        %v282 = vunpack.c.l.b16 %v250
        %v283 = vunpack.c.l.b16 %v251
        %v284 = vunpack.c.l.b16 %v252
        %v285 = vunpack.c.l.b16 %v253
        %v286 = vunpack.c.l.b16 %v254
        %v287 = vunpack.c.l.b16 %v255
        %v288 = vunpack.c.l.b16 %v256
        %v289 = vunpack.c.l.b16 %v257
        %v290 = vunpack.c.l.b16 %v258
        %v291 = vunpack.c.l.b16 %v259
        %v292 = vunpack.c.l.b16 %v260
        %v293 = vunpack.c.l.b16 %v261
        %v294 = vunpack.c.l.b16 %v262
        %v295 = vunpack.c.l.b16 %v263
        %v296 = vpack.c.b16 %v281, %v280
        %v297 = vpack.c.b16 %v283, %v282
        %v298 = vpack.c.b16 %v285, %v284
        %v299 = vpack.c.b16 %v287, %v286
        %v300 = vpack.c.b16 %v289, %v288
        %v301 = vpack.c.b16 %v291, %v290
        %v302 = vpack.c.b16 %v293, %v292
        %v303 = vpack.c.b16 %v295, %v294
        %vm304 = vcmask 64512
        %v306 = vsel %vm304, %v296, 0
        %v309 = vsel %vm304, %v297, 0
        %v312 = vsel %vm304, %v298, 0
        %v315 = vsel %vm304, %v299, 0
        %v318 = vsel %vm304, %v300, 0
        %v321 = vsel %vm304, %v301, 0
        %v324 = vsel %vm304, %v302, 0
        %v327 = vsel %vm304, %v303, 0
        %vm329 = vcmask 1043456
        %v331 = vsel %vm329, %v247, 0
        %333 = vmatprep.subr.bf16.mxu0 0
        %334 = vmatpush1.bf16.msra.mxu0 0
        %335 = vmatprep.subr.bf16.mxu0 0
        %336 = vmatpush1.bf16.msra.mxu0 0
        %337 = vmatprep.subr.bf16.mxu0 0
        %338 = vmatpush1.bf16.msra.mxu0 0
        %339 = vmatprep.subr.bf16.mxu0 0
        %340 = vmatpush1.bf16.msra.mxu0 0
        %341 = vmatprep.subr.bf16.mxu0 0
        %342 = vmatpush1.bf16.msra.mxu0 0
        %343 = vmatprep.subr.bf16.mxu0 0
        %344 = vmatpush1.bf16.msra.mxu0 0
        %345 = vmatprep.subr.bf16.mxu0 0
        %346 = vmatpush1.bf16.msra.mxu0 0
        %347 = vmatprep.subr.bf16.mxu0 0
        %348 = vmatpush1.bf16.msra.mxu0 %v331
        %349 = vmatprep.subr.bf16.mxu0 0
        %350 = vmatpush2.bf16.msra.mxu0 0
        %351 = vmatprep.subr.bf16.mxu0 0
        %352 = vmatpush2.bf16.msra.mxu0 0
        %353 = vmatprep.subr.bf16.mxu0 0
        %354 = vmatpush2.bf16.msra.mxu0 0
        %355 = vmatprep.subr.bf16.mxu0 0
        %356 = vmatpush2.bf16.msra.mxu0 0
        %357 = vmatprep.subr.bf16.mxu0 0
        %358 = vmatpush2.bf16.msra.mxu0 0
        %359 = vmatprep.subr.bf16.mxu0 0
        %360 = vmatpush2.bf16.msra.mxu0 0
        %361 = vmatprep.subr.bf16.mxu0 0
        %362 = vmatpush2.bf16.msra.mxu0 0
        %363 = vmatprep.subr.bf16.mxu0 0
        %364 = vmatpush2.bf16.msra.mxu0 0
        %365 = vmatprep.mubr.bf16.mxu0 0
        %366 = vmatmul.mubr.bf16.gmra.mxu0 %v306
        %v367 = vpop.f32.mrf.mxu0
        %v368 = vadd.f32 0.0, %v367
        %v369 = vpop.f32.mrf.mxu0
        %v370 = vpop.f32.mrf.mxu0
        %v371 = vadd.f32 0.0, %v370
        %v372 = vpop.f32.mrf.mxu0
        %373 = vmatprep.mubr.bf16.mxu0 0
        %374 = vmatmul.mubr.bf16.gmra.mxu0 %v309
        %v375 = vpop.f32.mrf.mxu0
        %v376 = vadd.f32 0.0, %v375
        %v377 = vpop.f32.mrf.mxu0
        %v378 = vpop.f32.mrf.mxu0
        %v379 = vadd.f32 0.0, %v378
        %v380 = vpop.f32.mrf.mxu0
        %381 = vmatprep.mubr.bf16.mxu0 0
        %382 = vmatmul.mubr.bf16.gmra.mxu0 %v312
        %v383 = vpop.f32.mrf.mxu0
        %v384 = vadd.f32 0.0, %v383
        %v385 = vpop.f32.mrf.mxu0
        %v386 = vpop.f32.mrf.mxu0
        %v387 = vadd.f32 0.0, %v386
        %v388 = vpop.f32.mrf.mxu0
        %389 = vmatprep.mubr.bf16.mxu0 0
        %390 = vmatmul.mubr.bf16.gmra.mxu0 %v315
        %v391 = vpop.f32.mrf.mxu0
        %v392 = vadd.f32 0.0, %v391
        %v393 = vpop.f32.mrf.mxu0
        %v394 = vpop.f32.mrf.mxu0
        %v395 = vadd.f32 0.0, %v394
        %v396 = vpop.f32.mrf.mxu0
        %397 = vmatprep.mubr.bf16.mxu0 0
        %398 = vmatmul.mubr.bf16.gmra.mxu0 %v318
        %v399 = vpop.f32.mrf.mxu0
        %v400 = vadd.f32 0.0, %v399
        %v401 = vpop.f32.mrf.mxu0
        %v402 = vpop.f32.mrf.mxu0
        %v403 = vadd.f32 0.0, %v402
        %v404 = vpop.f32.mrf.mxu0
        %405 = vmatprep.mubr.bf16.mxu0 0
        %406 = vmatmul.mubr.bf16.gmra.mxu0 %v321
        %v407 = vpop.f32.mrf.mxu0
        %v408 = vadd.f32 0.0, %v407
        %v409 = vpop.f32.mrf.mxu0
        %v410 = vpop.f32.mrf.mxu0
        %v411 = vadd.f32 0.0, %v410
        %v412 = vpop.f32.mrf.mxu0
        %413 = vmatprep.mubr.bf16.mxu0 0
        %414 = vmatmul.mubr.bf16.gmra.mxu0 %v324
        %v415 = vpop.f32.mrf.mxu0
        %v416 = vadd.f32 0.0, %v415
        %v417 = vpop.f32.mrf.mxu0
        %v418 = vpop.f32.mrf.mxu0
        %v419 = vadd.f32 0.0, %v418
        %v420 = vpop.f32.mrf.mxu0
        %421 = vmatprep.mubr.bf16.mxu0 0
        %422 = vmatmul.mubr.bf16.gmra.mxu0 %v327
        %v423 = vpop.f32.mrf.mxu0
        %v424 = vadd.f32 0.0, %v423
        %v425 = vpop.f32.mrf.mxu0
        %v426 = vpop.f32.mrf.mxu0
        %v427 = vadd.f32 0.0, %v426
        %v428 = vpop.f32.mrf.mxu0
        %429 = vdwg.mxu0
        %v430 = vld [vmem:[%s3] sm:$0xf]
        %v431 = vld [vmem:[%s3 + $0x4] sm:$0xf]
        %v432 = vld [vmem:[%s3 + $0x8] sm:$0xf]
        %v433 = vld [vmem:[%s3 + $0xc] sm:$0xf]
        %v434 = vld [vmem:[%s3 + $0x10] sm:$0xf]
        %v435 = vld [vmem:[%s3 + $0x14] sm:$0xf]
        %v436 = vld [vmem:[%s3 + $0x18] sm:$0xf]
        %v437 = vld [vmem:[%s3 + $0x1c] sm:$0xf]
        %v438 = vld [vmem:[%s3 + $0x20] sm:$0xf]
        %v439 = vld [vmem:[%s3 + $0x24] sm:$0xf]
        %v440 = vld [vmem:[%s3 + $0x28] sm:$0xf]
        %v441 = vld [vmem:[%s3 + $0x2c] sm:$0xf]
        %v442 = vld [vmem:[%s3 + $0x30] sm:$0xf]
        %v443 = vld [vmem:[%s3 + $0x34] sm:$0xf]
        %v444 = vld [vmem:[%s3 + $0x38] sm:$0xf]
        %v445 = vld [vmem:[%s3 + $0x3c] sm:$0xf]
        %v446 = vld [vmem:[%s2] sm:$0xff]
        %v447 = vld [vmem:[%s2 + $0x8] sm:$0xff]
        %v448 = vld [vmem:[%s2 + $0x10] sm:$0xff]
        %v449 = vld [vmem:[%s2 + $0x18] sm:$0xff]
        %v450 = vld [vmem:[%s2 + $0x20] sm:$0xff]
        %v451 = vld [vmem:[%s2 + $0x28] sm:$0xff]
        %v452 = vld [vmem:[%s2 + $0x30] sm:$0xff]
        %v453 = vld [vmem:[%s2 + $0x38] sm:$0xff]
        %v454 = vld [vmem:[%s2 + $0x40] sm:$0xff]
        %v455 = vld [vmem:[%s2 + $0x48] sm:$0xff]
        %v456 = vld [vmem:[%s2 + $0x50] sm:$0xff]
        %v457 = vld [vmem:[%s2 + $0x58] sm:$0xff]
        %v458 = vld [vmem:[%s2 + $0x60] sm:$0xff]
        %v459 = vld [vmem:[%s2 + $0x68] sm:$0xff]
        %v460 = vld [vmem:[%s2 + $0x70] sm:$0xff]
        %v461 = vld [vmem:[%s2 + $0x78] sm:$0xff]
        %v462 = vld [vmem:[%s4] sm:$0xff]
        %v463 = vld [vmem:[%s4 + $0x8] sm:$0xff]
        %v464 = vld [vmem:[%s4 + $0x10] sm:$0xff]
        %v465 = vld [vmem:[%s4 + $0x18] sm:$0xff]
        %v466 = vld [vmem:[%s4 + $0x20] sm:$0xff]
        %v467 = vld [vmem:[%s4 + $0x28] sm:$0xff]
        %v468 = vld [vmem:[%s4 + $0x30] sm:$0xff]
        %v469 = vld [vmem:[%s4 + $0x38] sm:$0xff]
        %v470 = vld [vmem:[%s4 + $0x40] sm:$0xff]
        %v471 = vld [vmem:[%s4 + $0x48] sm:$0xff]
        %v472 = vld [vmem:[%s4 + $0x50] sm:$0xff]
        %v473 = vld [vmem:[%s4 + $0x58] sm:$0xff]
        %v474 = vld [vmem:[%s4 + $0x60] sm:$0xff]
        %v475 = vld [vmem:[%s4 + $0x68] sm:$0xff]
        %v476 = vld [vmem:[%s4 + $0x70] sm:$0xff]
        %v477 = vld [vmem:[%s4 + $0x78] sm:$0xff]
        %479 = vset.pattern.permute.xlu0 0
        %480 = vperm.xlu0 %479, %v462
        %v481 = vpop.permute.xlu0 %480
        %484 = vset.pattern.permute.xlu0 0
        %485 = vperm.xlu0 %484, %v463
        %v486 = vpop.permute.xlu0 %485
        %489 = vset.pattern.permute.xlu0 0
        %490 = vperm.xlu0 %489, %v464
        %v491 = vpop.permute.xlu0 %490
        %494 = vset.pattern.permute.xlu0 0
        %495 = vperm.xlu0 %494, %v465
        %v496 = vpop.permute.xlu0 %495
        %499 = vset.pattern.permute.xlu0 0
        %500 = vperm.xlu0 %499, %v466
        %v501 = vpop.permute.xlu0 %500
        %504 = vset.pattern.permute.xlu0 0
        %505 = vperm.xlu0 %504, %v467
        %v506 = vpop.permute.xlu0 %505
        %509 = vset.pattern.permute.xlu0 0
        %510 = vperm.xlu0 %509, %v468
        %v511 = vpop.permute.xlu0 %510
        %514 = vset.pattern.permute.xlu0 0
        %515 = vperm.xlu0 %514, %v469
        %v516 = vpop.permute.xlu0 %515
        %519 = vset.pattern.permute.xlu0 0
        %520 = vperm.xlu0 %519, %v470
        %v521 = vpop.permute.xlu0 %520
        %524 = vset.pattern.permute.xlu0 0
        %525 = vperm.xlu0 %524, %v471
        %v526 = vpop.permute.xlu0 %525
        %529 = vset.pattern.permute.xlu0 0
        %530 = vperm.xlu0 %529, %v472
        %v531 = vpop.permute.xlu0 %530
        %534 = vset.pattern.permute.xlu0 0
        %535 = vperm.xlu0 %534, %v473
        %v536 = vpop.permute.xlu0 %535
        %539 = vset.pattern.permute.xlu0 0
        %540 = vperm.xlu0 %539, %v474
        %v541 = vpop.permute.xlu0 %540
        %544 = vset.pattern.permute.xlu0 0
        %545 = vperm.xlu0 %544, %v475
        %v546 = vpop.permute.xlu0 %545
        %549 = vset.pattern.permute.xlu0 0
        %550 = vperm.xlu0 %549, %v476
        %v551 = vpop.permute.xlu0 %550
        %554 = vset.pattern.permute.xlu0 0
        %555 = vperm.xlu0 %554, %v477
        %v556 = vpop.permute.xlu0 %555
        %559 = vset.pattern.permute.xlu0 0
        %560 = vperm.xlu0 %559, %v446
        %v561 = vpop.permute.xlu0 %560
        %564 = vset.pattern.permute.xlu0 0
        %565 = vperm.xlu0 %564, %v447
        %v566 = vpop.permute.xlu0 %565
        %569 = vset.pattern.permute.xlu0 0
        %570 = vperm.xlu0 %569, %v448
        %v571 = vpop.permute.xlu0 %570
        %574 = vset.pattern.permute.xlu0 0
        %575 = vperm.xlu0 %574, %v449
        %v576 = vpop.permute.xlu0 %575
        %579 = vset.pattern.permute.xlu0 0
        %580 = vperm.xlu0 %579, %v450
        %v581 = vpop.permute.xlu0 %580
        %584 = vset.pattern.permute.xlu0 0
        %585 = vperm.xlu0 %584, %v451
        %v586 = vpop.permute.xlu0 %585
        %589 = vset.pattern.permute.xlu0 0
        %590 = vperm.xlu0 %589, %v452
        %v591 = vpop.permute.xlu0 %590
        %594 = vset.pattern.permute.xlu0 0
        %595 = vperm.xlu0 %594, %v453
        %v596 = vpop.permute.xlu0 %595
        %599 = vset.pattern.permute.xlu0 0
        %600 = vperm.xlu0 %599, %v454
        %v601 = vpop.permute.xlu0 %600
        %604 = vset.pattern.permute.xlu0 0
        %605 = vperm.xlu0 %604, %v455
        %v606 = vpop.permute.xlu0 %605
        %609 = vset.pattern.permute.xlu0 0
        %610 = vperm.xlu0 %609, %v456
        %v611 = vpop.permute.xlu0 %610
        %614 = vset.pattern.permute.xlu0 0
        %615 = vperm.xlu0 %614, %v457
        %v616 = vpop.permute.xlu0 %615
        %619 = vset.pattern.permute.xlu0 0
        %620 = vperm.xlu0 %619, %v458
        %v621 = vpop.permute.xlu0 %620
        %624 = vset.pattern.permute.xlu0 0
        %625 = vperm.xlu0 %624, %v459
        %v626 = vpop.permute.xlu0 %625
        %629 = vset.pattern.permute.xlu0 0
        %630 = vperm.xlu0 %629, %v460
        %v631 = vpop.permute.xlu0 %630
        %634 = vset.pattern.permute.xlu0 0
        %635 = vperm.xlu0 %634, %v461
        %v636 = vpop.permute.xlu0 %635
        %v638 = vmul.f32 %v368, %v561
        %v639 = vmul.f32 %v371, %v566
        %v640 = vmul.f32 %v376, %v571
        %v641 = vmul.f32 %v379, %v576
        %v642 = vmul.f32 %v384, %v581
        %v643 = vmul.f32 %v387, %v586
        %v644 = vmul.f32 %v392, %v591
        %v645 = vmul.f32 %v395, %v596
        %v646 = vmul.f32 %v400, %v601
        %v647 = vmul.f32 %v403, %v606
        %v648 = vmul.f32 %v408, %v611
        %v649 = vmul.f32 %v411, %v616
        %v650 = vmul.f32 %v416, %v621
        %v651 = vmul.f32 %v419, %v626
        %v652 = vmul.f32 %v424, %v631
        %v653 = vmul.f32 %v427, %v636
        %v654 = vpack.c.bf16 %v639, %v638
        %v655 = vpack.c.bf16 %v641, %v640
        %v656 = vpack.c.bf16 %v643, %v642
        %v657 = vpack.c.bf16 %v645, %v644
        %v658 = vpack.c.bf16 %v647, %v646
        %v659 = vpack.c.bf16 %v649, %v648
        %v660 = vpack.c.bf16 %v651, %v650
        %v661 = vpack.c.bf16 %v653, %v652
        %v662 = vtanh.bf16.pop %v654
        %v663 = vtanh.bf16.pop %v655
        %v664 = vtanh.bf16.pop %v656
        %v665 = vtanh.bf16.pop %v657
        %v666 = vtanh.bf16.pop %v658
        %v667 = vtanh.bf16.pop %v659
        %v668 = vtanh.bf16.pop %v660
        %v669 = vtanh.bf16.pop %v661
        %v686 = vunpack.c.l.b16 %v430
        %v687 = vunpack.c.l.b16 %v431
        %v688 = vunpack.c.l.b16 %v432
        %v689 = vunpack.c.l.b16 %v433
        %v690 = vunpack.c.l.b16 %v434
        %v691 = vunpack.c.l.b16 %v435
        %v692 = vunpack.c.l.b16 %v436
        %v693 = vunpack.c.l.b16 %v437
        %v694 = vunpack.c.l.b16 %v438
        %v695 = vunpack.c.l.b16 %v439
        %v696 = vunpack.c.l.b16 %v440
        %v697 = vunpack.c.l.b16 %v441
        %v698 = vunpack.c.l.b16 %v442
        %v699 = vunpack.c.l.b16 %v443
        %v700 = vunpack.c.l.b16 %v444
        %v701 = vunpack.c.l.b16 %v445
        %v702 = vpack.c.b16 %v687, %v686
        %v703 = vpack.c.b16 %v689, %v688
        %v704 = vpack.c.b16 %v691, %v690
        %v705 = vpack.c.b16 %v693, %v692
        %v706 = vpack.c.b16 %v695, %v694
        %v707 = vpack.c.b16 %v697, %v696
        %v708 = vpack.c.b16 %v699, %v698
        %v709 = vpack.c.b16 %v701, %v700
        %718 = vmatprep.subr.bf16.mxu0 0
        %719 = vmatpush1.bf16.msra.mxu0 %v669
        %720 = vmatprep.subr.bf16.mxu0 0
        %721 = vmatpush1.bf16.msra.mxu0 %v668
        %722 = vmatprep.subr.bf16.mxu0 0
        %723 = vmatpush1.bf16.msra.mxu0 %v667
        %724 = vmatprep.subr.bf16.mxu0 0
        %725 = vmatpush1.bf16.msra.mxu0 %v666
        %726 = vmatprep.subr.bf16.mxu0 0
        %727 = vmatpush1.bf16.msra.mxu0 %v665
        %728 = vmatprep.subr.bf16.mxu0 0
        %729 = vmatpush1.bf16.msra.mxu0 %v664
        %730 = vmatprep.subr.bf16.mxu0 0
        %731 = vmatpush1.bf16.msra.mxu0 %v663
        %732 = vmatprep.subr.bf16.mxu0 0
        %733 = vmatpush1.bf16.msra.mxu0 %v662
        %734 = vmatprep.subr.bf16.mxu0 0
        %735 = vmatpush2.bf16.msra.mxu0 0
        %736 = vmatprep.subr.bf16.mxu0 0
        %737 = vmatpush2.bf16.msra.mxu0 0
        %738 = vmatprep.subr.bf16.mxu0 0
        %739 = vmatpush2.bf16.msra.mxu0 0
        %740 = vmatprep.subr.bf16.mxu0 0
        %741 = vmatpush2.bf16.msra.mxu0 0
        %742 = vmatprep.subr.bf16.mxu0 0
        %743 = vmatpush2.bf16.msra.mxu0 0
        %744 = vmatprep.subr.bf16.mxu0 0
        %745 = vmatpush2.bf16.msra.mxu0 0
        %746 = vmatprep.subr.bf16.mxu0 0
        %747 = vmatpush2.bf16.msra.mxu0 0
        %748 = vmatprep.subr.bf16.mxu0 0
        %749 = vmatpush2.bf16.msra.mxu0 0
        %750 = vmatprep.mubr.bf16.mxu0 0
        %751 = vmatmul.mubr.bf16.gmra.mxu0 %v702
        %v752 = vpop.f32.mrf.mxu0
        %v753 = vadd.f32 %v481, %v752
        %v754 = vpop.f32.mrf.mxu0
        %v755 = vpop.f32.mrf.mxu0
        %v756 = vadd.f32 %v486, %v755
        %v757 = vpop.f32.mrf.mxu0
        %758 = vmatprep.mubr.bf16.mxu0 0
        %759 = vmatmul.mubr.bf16.gmra.mxu0 %v703
        %v760 = vpop.f32.mrf.mxu0
        %v761 = vadd.f32 %v491, %v760
        %v762 = vpop.f32.mrf.mxu0
        %v763 = vpop.f32.mrf.mxu0
        %v764 = vadd.f32 %v496, %v763
        %v765 = vpop.f32.mrf.mxu0
        %766 = vmatprep.mubr.bf16.mxu0 0
        %767 = vmatmul.mubr.bf16.gmra.mxu0 %v704
        %v768 = vpop.f32.mrf.mxu0
        %v769 = vadd.f32 %v501, %v768
        %v770 = vpop.f32.mrf.mxu0
        %v771 = vpop.f32.mrf.mxu0
        %v772 = vadd.f32 %v506, %v771
        %v773 = vpop.f32.mrf.mxu0
        %774 = vmatprep.mubr.bf16.mxu0 0
        %775 = vmatmul.mubr.bf16.gmra.mxu0 %v705
        %v776 = vpop.f32.mrf.mxu0
        %v777 = vadd.f32 %v511, %v776
        %v778 = vpop.f32.mrf.mxu0
        %v779 = vpop.f32.mrf.mxu0
        %v780 = vadd.f32 %v516, %v779
        %v781 = vpop.f32.mrf.mxu0
        %782 = vmatprep.mubr.bf16.mxu0 0
        %783 = vmatmul.mubr.bf16.gmra.mxu0 %v706
        %v784 = vpop.f32.mrf.mxu0
        %v785 = vadd.f32 %v521, %v784
        %v786 = vpop.f32.mrf.mxu0
        %v787 = vpop.f32.mrf.mxu0
        %v788 = vadd.f32 %v526, %v787
        %v789 = vpop.f32.mrf.mxu0
        %790 = vmatprep.mubr.bf16.mxu0 0
        %791 = vmatmul.mubr.bf16.gmra.mxu0 %v707
        %v792 = vpop.f32.mrf.mxu0
        %v793 = vadd.f32 %v531, %v792
        %v794 = vpop.f32.mrf.mxu0
        %v795 = vpop.f32.mrf.mxu0
        %v796 = vadd.f32 %v536, %v795
        %v797 = vpop.f32.mrf.mxu0
        %798 = vmatprep.mubr.bf16.mxu0 0
        %799 = vmatmul.mubr.bf16.gmra.mxu0 %v708
        %v800 = vpop.f32.mrf.mxu0
        %v801 = vadd.f32 %v541, %v800
        %v802 = vpop.f32.mrf.mxu0
        %v803 = vpop.f32.mrf.mxu0
        %v804 = vadd.f32 %v546, %v803
        %v805 = vpop.f32.mrf.mxu0
        %806 = vmatprep.mubr.bf16.mxu0 0
        %807 = vmatmul.mubr.bf16.gmra.mxu0 %v709
        %v808 = vpop.f32.mrf.mxu0
        %v809 = vadd.f32 %v551, %v808
        %v810 = vpop.f32.mrf.mxu0
        %v811 = vpop.f32.mrf.mxu0
        %v812 = vadd.f32 %v556, %v811
        %v813 = vpop.f32.mrf.mxu0
        %814 = vdwg.mxu0
        %815 = vst [vmem:[%s237] sm:$0xff] %v753
        %816 = vst [vmem:[%s237 + $0x8] sm:$0xff] %v756
        %817 = vst [vmem:[%s237 + $0x10] sm:$0xff] %v761
        %818 = vst [vmem:[%s237 + $0x18] sm:$0xff] %v764
        %819 = vst [vmem:[%s237 + $0x20] sm:$0xff] %v769
        %820 = vst [vmem:[%s237 + $0x28] sm:$0xff] %v772
        %821 = vst [vmem:[%s237 + $0x30] sm:$0xff] %v777
        %822 = vst [vmem:[%s237 + $0x38] sm:$0xff] %v780
        %823 = vst [vmem:[%s237 + $0x40] sm:$0xff] %v785
        %824 = vst [vmem:[%s237 + $0x48] sm:$0xff] %v788
        %825 = vst [vmem:[%s237 + $0x50] sm:$0xff] %v793
        %826 = vst [vmem:[%s237 + $0x58] sm:$0xff] %v796
        %827 = vst [vmem:[%s237 + $0x60] sm:$0xff] %v801
        %828 = vst [vmem:[%s237 + $0x68] sm:$0xff] %v804
        %829 = vst [vmem:[%s237 + $0x70] sm:$0xff] %v809
        %830 = vst [vmem:[%s237 + $0x78] sm:$0xff] %v812
        %831 = vset.pattern.permute.xlu0 1
        %832 = vperm.xlu0 %831, %v446
        %v833 = vpop.permute.xlu0 %832
        %835 = vset.pattern.permute.xlu0 1
        %836 = vperm.xlu0 %835, %v447
        %v837 = vpop.permute.xlu0 %836
        %839 = vset.pattern.permute.xlu0 1
        %840 = vperm.xlu0 %839, %v448
        %v841 = vpop.permute.xlu0 %840
        %843 = vset.pattern.permute.xlu0 1
        %844 = vperm.xlu0 %843, %v449
        %v845 = vpop.permute.xlu0 %844
        %847 = vset.pattern.permute.xlu0 1
        %848 = vperm.xlu0 %847, %v450
        %v849 = vpop.permute.xlu0 %848
        %851 = vset.pattern.permute.xlu0 1
        %852 = vperm.xlu0 %851, %v451
        %v853 = vpop.permute.xlu0 %852
        %855 = vset.pattern.permute.xlu0 1
        %856 = vperm.xlu0 %855, %v452
        %v857 = vpop.permute.xlu0 %856
        %859 = vset.pattern.permute.xlu0 1
        %860 = vperm.xlu0 %859, %v453
        %v861 = vpop.permute.xlu0 %860
        %863 = vset.pattern.permute.xlu0 1
        %864 = vperm.xlu0 %863, %v454
        %v865 = vpop.permute.xlu0 %864
        %867 = vset.pattern.permute.xlu0 1
        %868 = vperm.xlu0 %867, %v455
        %v869 = vpop.permute.xlu0 %868
        %871 = vset.pattern.permute.xlu0 1
        %872 = vperm.xlu0 %871, %v456
        %v873 = vpop.permute.xlu0 %872
        %875 = vset.pattern.permute.xlu0 1
        %876 = vperm.xlu0 %875, %v457
        %v877 = vpop.permute.xlu0 %876
        %879 = vset.pattern.permute.xlu0 1
        %880 = vperm.xlu0 %879, %v458
        %v881 = vpop.permute.xlu0 %880
        %883 = vset.pattern.permute.xlu0 1
        %884 = vperm.xlu0 %883, %v459
        %v885 = vpop.permute.xlu0 %884
        %887 = vset.pattern.permute.xlu0 1
        %888 = vperm.xlu0 %887, %v460
        %v889 = vpop.permute.xlu0 %888
        %891 = vset.pattern.permute.xlu0 1
        %892 = vperm.xlu0 %891, %v461
        %v893 = vpop.permute.xlu0 %892
        %v895 = vmul.f32 %v368, %v833
        %v896 = vmul.f32 %v371, %v837
        %v897 = vmul.f32 %v376, %v841
        %v898 = vmul.f32 %v379, %v845
        %v899 = vmul.f32 %v384, %v849
        %v900 = vmul.f32 %v387, %v853
        %v901 = vmul.f32 %v392, %v857
        %v902 = vmul.f32 %v395, %v861
        %v903 = vmul.f32 %v400, %v865
        %v904 = vmul.f32 %v403, %v869
        %v905 = vmul.f32 %v408, %v873
        %v906 = vmul.f32 %v411, %v877
        %v907 = vmul.f32 %v416, %v881
        %v908 = vmul.f32 %v419, %v885
        %v909 = vmul.f32 %v424, %v889
        %v910 = vmul.f32 %v427, %v893
        %v911 = vpack.c.bf16 %v896, %v895
        %v912 = vpack.c.bf16 %v898, %v897
        %v913 = vpack.c.bf16 %v900, %v899
        %v914 = vpack.c.bf16 %v902, %v901
        %v915 = vpack.c.bf16 %v904, %v903
        %v916 = vpack.c.bf16 %v906, %v905
        %v917 = vpack.c.bf16 %v908, %v907
        %v918 = vpack.c.bf16 %v910, %v909
        %v919 = vtanh.bf16.pop %v911
        %v920 = vtanh.bf16.pop %v912
        %v921 = vtanh.bf16.pop %v913
        %v922 = vtanh.bf16.pop %v914
        %v923 = vtanh.bf16.pop %v915
        %v924 = vtanh.bf16.pop %v916
        %v925 = vtanh.bf16.pop %v917
        %v926 = vtanh.bf16.pop %v918
        %927 = vmatprep.subr.bf16.mxu0 0
        %928 = vmatpush1.bf16.msra.mxu0 %v926
        %929 = vmatprep.subr.bf16.mxu0 0
        %930 = vmatpush1.bf16.msra.mxu0 %v925
        %931 = vmatprep.subr.bf16.mxu0 0
        %932 = vmatpush1.bf16.msra.mxu0 %v924
        %933 = vmatprep.subr.bf16.mxu0 0
        %934 = vmatpush1.bf16.msra.mxu0 %v923
        %935 = vmatprep.subr.bf16.mxu0 0
        %936 = vmatpush1.bf16.msra.mxu0 %v922
        %937 = vmatprep.subr.bf16.mxu0 0
        %938 = vmatpush1.bf16.msra.mxu0 %v921
        %939 = vmatprep.subr.bf16.mxu0 0
        %940 = vmatpush1.bf16.msra.mxu0 %v920
        %941 = vmatprep.subr.bf16.mxu0 0
        %942 = vmatpush1.bf16.msra.mxu0 %v919
        %943 = vmatprep.subr.bf16.mxu0 0
        %944 = vmatpush2.bf16.msra.mxu0 0
        %945 = vmatprep.subr.bf16.mxu0 0
        %946 = vmatpush2.bf16.msra.mxu0 0
        %947 = vmatprep.subr.bf16.mxu0 0
        %948 = vmatpush2.bf16.msra.mxu0 0
        %949 = vmatprep.subr.bf16.mxu0 0
        %950 = vmatpush2.bf16.msra.mxu0 0
        %951 = vmatprep.subr.bf16.mxu0 0
        %952 = vmatpush2.bf16.msra.mxu0 0
        %953 = vmatprep.subr.bf16.mxu0 0
        %954 = vmatpush2.bf16.msra.mxu0 0
        %955 = vmatprep.subr.bf16.mxu0 0
        %956 = vmatpush2.bf16.msra.mxu0 0
        %957 = vmatprep.subr.bf16.mxu0 0
        %958 = vmatpush2.bf16.msra.mxu0 0
        %959 = vmatprep.mubr.bf16.mxu0 0
        %960 = vmatmul.mubr.bf16.gmra.mxu0 %v702
        %v961 = vpop.f32.mrf.mxu0
        %v962 = vadd.f32 %v481, %v961
        %v963 = vpop.f32.mrf.mxu0
        %v964 = vpop.f32.mrf.mxu0
        %v965 = vadd.f32 %v486, %v964
        %v966 = vpop.f32.mrf.mxu0
        %967 = vmatprep.mubr.bf16.mxu0 0
        %968 = vmatmul.mubr.bf16.gmra.mxu0 %v703
        %v969 = vpop.f32.mrf.mxu0
        %v970 = vadd.f32 %v491, %v969
        %v971 = vpop.f32.mrf.mxu0
        %v972 = vpop.f32.mrf.mxu0
        %v973 = vadd.f32 %v496, %v972
        %v974 = vpop.f32.mrf.mxu0
        %975 = vmatprep.mubr.bf16.mxu0 0
        %976 = vmatmul.mubr.bf16.gmra.mxu0 %v704
        %v977 = vpop.f32.mrf.mxu0
        %v978 = vadd.f32 %v501, %v977
        %v979 = vpop.f32.mrf.mxu0
        %v980 = vpop.f32.mrf.mxu0
        %v981 = vadd.f32 %v506, %v980
        %v982 = vpop.f32.mrf.mxu0
        %983 = vmatprep.mubr.bf16.mxu0 0
        %984 = vmatmul.mubr.bf16.gmra.mxu0 %v705
        %v985 = vpop.f32.mrf.mxu0
        %v986 = vadd.f32 %v511, %v985
        %v987 = vpop.f32.mrf.mxu0
        %v988 = vpop.f32.mrf.mxu0
        %v989 = vadd.f32 %v516, %v988
        %v990 = vpop.f32.mrf.mxu0
        %991 = vmatprep.mubr.bf16.mxu0 0
        %992 = vmatmul.mubr.bf16.gmra.mxu0 %v706
        %v993 = vpop.f32.mrf.mxu0
        %v994 = vadd.f32 %v521, %v993
        %v995 = vpop.f32.mrf.mxu0
        %v996 = vpop.f32.mrf.mxu0
        %v997 = vadd.f32 %v526, %v996
        %v998 = vpop.f32.mrf.mxu0
        %999 = vmatprep.mubr.bf16.mxu0 0
        %1000 = vmatmul.mubr.bf16.gmra.mxu0 %v707
        %v1001 = vpop.f32.mrf.mxu0
        %v1002 = vadd.f32 %v531, %v1001
        %v1003 = vpop.f32.mrf.mxu0
        %v1004 = vpop.f32.mrf.mxu0
        %v1005 = vadd.f32 %v536, %v1004
        %v1006 = vpop.f32.mrf.mxu0
        %1007 = vmatprep.mubr.bf16.mxu0 0
        %1008 = vmatmul.mubr.bf16.gmra.mxu0 %v708
        %v1009 = vpop.f32.mrf.mxu0
        %v1010 = vadd.f32 %v541, %v1009
        %v1011 = vpop.f32.mrf.mxu0
        %v1012 = vpop.f32.mrf.mxu0
        %v1013 = vadd.f32 %v546, %v1012
        %v1014 = vpop.f32.mrf.mxu0
        %1015 = vmatprep.mubr.bf16.mxu0 0
        %1016 = vmatmul.mubr.bf16.gmra.mxu0 %v709
        %v1017 = vpop.f32.mrf.mxu0
        %v1018 = vadd.f32 %v551, %v1017
        %v1019 = vpop.f32.mrf.mxu0
        %v1020 = vpop.f32.mrf.mxu0
        %v1021 = vadd.f32 %v556, %v1020
        %v1022 = vpop.f32.mrf.mxu0
        %1023 = vdwg.mxu0
        %s1024 = scalar_lea.vmem %s237, 128 [#allocation2]
        %1025 = vst [vmem:[%s1024] sm:$0xff] %v962
        %1026 = vst [vmem:[%s1024 + $0x8] sm:$0xff] %v965
        %1027 = vst [vmem:[%s1024 + $0x10] sm:$0xff] %v970
        %1028 = vst [vmem:[%s1024 + $0x18] sm:$0xff] %v973
        %1029 = vst [vmem:[%s1024 + $0x20] sm:$0xff] %v978
        %1030 = vst [vmem:[%s1024 + $0x28] sm:$0xff] %v981
        %1031 = vst [vmem:[%s1024 + $0x30] sm:$0xff] %v986
        %1032 = vst [vmem:[%s1024 + $0x38] sm:$0xff] %v989
        %1033 = vst [vmem:[%s1024 + $0x40] sm:$0xff] %v994
        %1034 = vst [vmem:[%s1024 + $0x48] sm:$0xff] %v997
        %1035 = vst [vmem:[%s1024 + $0x50] sm:$0xff] %v1002
        %1036 = vst [vmem:[%s1024 + $0x58] sm:$0xff] %v1005
        %1037 = vst [vmem:[%s1024 + $0x60] sm:$0xff] %v1010
        %1038 = vst [vmem:[%s1024 + $0x68] sm:$0xff] %v1013
        %1039 = vst [vmem:[%s1024 + $0x70] sm:$0xff] %v1018
        %1040 = vst [vmem:[%s1024 + $0x78] sm:$0xff] %v1021
        %1041 = vset.pattern.permute.xlu0 2
        %1042 = vperm.xlu0 %1041, %v446
        %v1043 = vpop.permute.xlu0 %1042
        %1045 = vset.pattern.permute.xlu0 2
        %1046 = vperm.xlu0 %1045, %v447
        %v1047 = vpop.permute.xlu0 %1046
        %1049 = vset.pattern.permute.xlu0 2
        %1050 = vperm.xlu0 %1049, %v448
        %v1051 = vpop.permute.xlu0 %1050
        %1053 = vset.pattern.permute.xlu0 2
        %1054 = vperm.xlu0 %1053, %v449
        %v1055 = vpop.permute.xlu0 %1054
        %1057 = vset.pattern.permute.xlu0 2
        %1058 = vperm.xlu0 %1057, %v450
        %v1059 = vpop.permute.xlu0 %1058
        %1061 = vset.pattern.permute.xlu0 2
        %1062 = vperm.xlu0 %1061, %v451
        %v1063 = vpop.permute.xlu0 %1062
        %1065 = vset.pattern.permute.xlu0 2
        %1066 = vperm.xlu0 %1065, %v452
        %v1067 = vpop.permute.xlu0 %1066
        %1069 = vset.pattern.permute.xlu0 2
        %1070 = vperm.xlu0 %1069, %v453
        %v1071 = vpop.permute.xlu0 %1070
        %1073 = vset.pattern.permute.xlu0 2
        %1074 = vperm.xlu0 %1073, %v454
        %v1075 = vpop.permute.xlu0 %1074
        %1077 = vset.pattern.permute.xlu0 2
        %1078 = vperm.xlu0 %1077, %v455
        %v1079 = vpop.permute.xlu0 %1078
        %1081 = vset.pattern.permute.xlu0 2
        %1082 = vperm.xlu0 %1081, %v456
        %v1083 = vpop.permute.xlu0 %1082
        %1085 = vset.pattern.permute.xlu0 2
        %1086 = vperm.xlu0 %1085, %v457
        %v1087 = vpop.permute.xlu0 %1086
        %1089 = vset.pattern.permute.xlu0 2
        %1090 = vperm.xlu0 %1089, %v458
        %v1091 = vpop.permute.xlu0 %1090
        %1093 = vset.pattern.permute.xlu0 2
        %1094 = vperm.xlu0 %1093, %v459
        %v1095 = vpop.permute.xlu0 %1094
        %1097 = vset.pattern.permute.xlu0 2
        %1098 = vperm.xlu0 %1097, %v460
        %v1099 = vpop.permute.xlu0 %1098
        %1101 = vset.pattern.permute.xlu0 2
        %1102 = vperm.xlu0 %1101, %v461
        %v1103 = vpop.permute.xlu0 %1102
        %v1105 = vmul.f32 %v368, %v1043
        %v1106 = vmul.f32 %v371, %v1047
        %v1107 = vmul.f32 %v376, %v1051
        %v1108 = vmul.f32 %v379, %v1055
        %v1109 = vmul.f32 %v384, %v1059
        %v1110 = vmul.f32 %v387, %v1063
        %v1111 = vmul.f32 %v392, %v1067
        %v1112 = vmul.f32 %v395, %v1071
        %v1113 = vmul.f32 %v400, %v1075
        %v1114 = vmul.f32 %v403, %v1079
        %v1115 = vmul.f32 %v408, %v1083
        %v1116 = vmul.f32 %v411, %v1087
        %v1117 = vmul.f32 %v416, %v1091
        %v1118 = vmul.f32 %v419, %v1095
        %v1119 = vmul.f32 %v424, %v1099
        %v1120 = vmul.f32 %v427, %v1103
        %v1121 = vpack.c.bf16 %v1106, %v1105
        %v1122 = vpack.c.bf16 %v1108, %v1107
        %v1123 = vpack.c.bf16 %v1110, %v1109
        %v1124 = vpack.c.bf16 %v1112, %v1111
        %v1125 = vpack.c.bf16 %v1114, %v1113
        %v1126 = vpack.c.bf16 %v1116, %v1115
        %v1127 = vpack.c.bf16 %v1118, %v1117
        %v1128 = vpack.c.bf16 %v1120, %v1119
        %v1129 = vtanh.bf16.pop %v1121
        %v1130 = vtanh.bf16.pop %v1122
        %v1131 = vtanh.bf16.pop %v1123
        %v1132 = vtanh.bf16.pop %v1124
        %v1133 = vtanh.bf16.pop %v1125
        %v1134 = vtanh.bf16.pop %v1126
        %v1135 = vtanh.bf16.pop %v1127
        %v1136 = vtanh.bf16.pop %v1128
        %1137 = vmatprep.subr.bf16.mxu0 0
        %1138 = vmatpush1.bf16.msra.mxu0 %v1136
        %1139 = vmatprep.subr.bf16.mxu0 0
        %1140 = vmatpush1.bf16.msra.mxu0 %v1135
        %1141 = vmatprep.subr.bf16.mxu0 0
        %1142 = vmatpush1.bf16.msra.mxu0 %v1134
        %1143 = vmatprep.subr.bf16.mxu0 0
        %1144 = vmatpush1.bf16.msra.mxu0 %v1133
        %1145 = vmatprep.subr.bf16.mxu0 0
        %1146 = vmatpush1.bf16.msra.mxu0 %v1132
        %1147 = vmatprep.subr.bf16.mxu0 0
        %1148 = vmatpush1.bf16.msra.mxu0 %v1131
        %1149 = vmatprep.subr.bf16.mxu0 0
        %1150 = vmatpush1.bf16.msra.mxu0 %v1130
        %1151 = vmatprep.subr.bf16.mxu0 0
        %1152 = vmatpush1.bf16.msra.mxu0 %v1129
        %1153 = vmatprep.subr.bf16.mxu0 0
        %1154 = vmatpush2.bf16.msra.mxu0 0
        %1155 = vmatprep.subr.bf16.mxu0 0
        %1156 = vmatpush2.bf16.msra.mxu0 0
        %1157 = vmatprep.subr.bf16.mxu0 0
        %1158 = vmatpush2.bf16.msra.mxu0 0
        %1159 = vmatprep.subr.bf16.mxu0 0
        %1160 = vmatpush2.bf16.msra.mxu0 0
        %1161 = vmatprep.subr.bf16.mxu0 0
        %1162 = vmatpush2.bf16.msra.mxu0 0
        %1163 = vmatprep.subr.bf16.mxu0 0
        %1164 = vmatpush2.bf16.msra.mxu0 0
        %1165 = vmatprep.subr.bf16.mxu0 0
        %1166 = vmatpush2.bf16.msra.mxu0 0
        %1167 = vmatprep.subr.bf16.mxu0 0
        %1168 = vmatpush2.bf16.msra.mxu0 0
        %1169 = vmatprep.mubr.bf16.mxu0 0
        %1170 = vmatmul.mubr.bf16.gmra.mxu0 %v702
        %v1171 = vpop.f32.mrf.mxu0
        %v1172 = vadd.f32 %v481, %v1171
        %v1173 = vpop.f32.mrf.mxu0
        %v1174 = vpop.f32.mrf.mxu0
        %v1175 = vadd.f32 %v486, %v1174
        %v1176 = vpop.f32.mrf.mxu0
        %1177 = vmatprep.mubr.bf16.mxu0 0
        %1178 = vmatmul.mubr.bf16.gmra.mxu0 %v703
        %v1179 = vpop.f32.mrf.mxu0
        %v1180 = vadd.f32 %v491, %v1179
        %v1181 = vpop.f32.mrf.mxu0
        %v1182 = vpop.f32.mrf.mxu0
        %v1183 = vadd.f32 %v496, %v1182
        %v1184 = vpop.f32.mrf.mxu0
        %1185 = vmatprep.mubr.bf16.mxu0 0
        %1186 = vmatmul.mubr.bf16.gmra.mxu0 %v704
        %v1187 = vpop.f32.mrf.mxu0
        %v1188 = vadd.f32 %v501, %v1187
        %v1189 = vpop.f32.mrf.mxu0
        %v1190 = vpop.f32.mrf.mxu0
        %v1191 = vadd.f32 %v506, %v1190
        %v1192 = vpop.f32.mrf.mxu0
        %1193 = vmatprep.mubr.bf16.mxu0 0
        %1194 = vmatmul.mubr.bf16.gmra.mxu0 %v705
        %v1195 = vpop.f32.mrf.mxu0
        %v1196 = vadd.f32 %v511, %v1195
        %v1197 = vpop.f32.mrf.mxu0
        %v1198 = vpop.f32.mrf.mxu0
        %v1199 = vadd.f32 %v516, %v1198
        %v1200 = vpop.f32.mrf.mxu0
        %1201 = vmatprep.mubr.bf16.mxu0 0
        %1202 = vmatmul.mubr.bf16.gmra.mxu0 %v706
        %v1203 = vpop.f32.mrf.mxu0
        %v1204 = vadd.f32 %v521, %v1203
        %v1205 = vpop.f32.mrf.mxu0
        %v1206 = vpop.f32.mrf.mxu0
        %v1207 = vadd.f32 %v526, %v1206
        %v1208 = vpop.f32.mrf.mxu0
        %1209 = vmatprep.mubr.bf16.mxu0 0
        %1210 = vmatmul.mubr.bf16.gmra.mxu0 %v707
        %v1211 = vpop.f32.mrf.mxu0
        %v1212 = vadd.f32 %v531, %v1211
        %v1213 = vpop.f32.mrf.mxu0
        %v1214 = vpop.f32.mrf.mxu0
        %v1215 = vadd.f32 %v536, %v1214
        %v1216 = vpop.f32.mrf.mxu0
        %1217 = vmatprep.mubr.bf16.mxu0 0
        %1218 = vmatmul.mubr.bf16.gmra.mxu0 %v708
        %v1219 = vpop.f32.mrf.mxu0
        %v1220 = vadd.f32 %v541, %v1219
        %v1221 = vpop.f32.mrf.mxu0
        %v1222 = vpop.f32.mrf.mxu0
        %v1223 = vadd.f32 %v546, %v1222
        %v1224 = vpop.f32.mrf.mxu0
        %1225 = vmatprep.mubr.bf16.mxu0 0
        %1226 = vmatmul.mubr.bf16.gmra.mxu0 %v709
        %v1227 = vpop.f32.mrf.mxu0
        %v1228 = vadd.f32 %v551, %v1227
        %v1229 = vpop.f32.mrf.mxu0
        %v1230 = vpop.f32.mrf.mxu0
        %v1231 = vadd.f32 %v556, %v1230
        %v1232 = vpop.f32.mrf.mxu0
        %1233 = vdwg.mxu0
        %s1234 = scalar_lea.vmem %s237, 256 [#allocation2]
        %1235 = vst [vmem:[%s1234] sm:$0xff] %v1172
        %1236 = vst [vmem:[%s1234 + $0x8] sm:$0xff] %v1175
        %1237 = vst [vmem:[%s1234 + $0x10] sm:$0xff] %v1180
        %1238 = vst [vmem:[%s1234 + $0x18] sm:$0xff] %v1183
        %1239 = vst [vmem:[%s1234 + $0x20] sm:$0xff] %v1188
        %1240 = vst [vmem:[%s1234 + $0x28] sm:$0xff] %v1191
        %1241 = vst [vmem:[%s1234 + $0x30] sm:$0xff] %v1196
        %1242 = vst [vmem:[%s1234 + $0x38] sm:$0xff] %v1199
        %1243 = vst [vmem:[%s1234 + $0x40] sm:$0xff] %v1204
        %1244 = vst [vmem:[%s1234 + $0x48] sm:$0xff] %v1207
        %1245 = vst [vmem:[%s1234 + $0x50] sm:$0xff] %v1212
        %1246 = vst [vmem:[%s1234 + $0x58] sm:$0xff] %v1215
        %1247 = vst [vmem:[%s1234 + $0x60] sm:$0xff] %v1220
        %1248 = vst [vmem:[%s1234 + $0x68] sm:$0xff] %v1223
        %1249 = vst [vmem:[%s1234 + $0x70] sm:$0xff] %v1228
        %1250 = vst [vmem:[%s1234 + $0x78] sm:$0xff] %v1231
        %1251 = vset.pattern.permute.xlu0 3
        %1252 = vperm.xlu0 %1251, %v446
        %v1253 = vpop.permute.xlu0 %1252
        %1255 = vset.pattern.permute.xlu0 3
        %1256 = vperm.xlu0 %1255, %v447
        %v1257 = vpop.permute.xlu0 %1256
        %1259 = vset.pattern.permute.xlu0 3
        %1260 = vperm.xlu0 %1259, %v448
        %v1261 = vpop.permute.xlu0 %1260
        %1263 = vset.pattern.permute.xlu0 3
        %1264 = vperm.xlu0 %1263, %v449
        %v1265 = vpop.permute.xlu0 %1264
        %1267 = vset.pattern.permute.xlu0 3
        %1268 = vperm.xlu0 %1267, %v450
        %v1269 = vpop.permute.xlu0 %1268
        %1271 = vset.pattern.permute.xlu0 3
        %1272 = vperm.xlu0 %1271, %v451
        %v1273 = vpop.permute.xlu0 %1272
        %1275 = vset.pattern.permute.xlu0 3
        %1276 = vperm.xlu0 %1275, %v452
        %v1277 = vpop.permute.xlu0 %1276
        %1279 = vset.pattern.permute.xlu0 3
        %1280 = vperm.xlu0 %1279, %v453
        %v1281 = vpop.permute.xlu0 %1280
        %1283 = vset.pattern.permute.xlu0 3
        %1284 = vperm.xlu0 %1283, %v454
        %v1285 = vpop.permute.xlu0 %1284
        %1287 = vset.pattern.permute.xlu0 3
        %1288 = vperm.xlu0 %1287, %v455
        %v1289 = vpop.permute.xlu0 %1288
        %1291 = vset.pattern.permute.xlu0 3
        %1292 = vperm.xlu0 %1291, %v456
        %v1293 = vpop.permute.xlu0 %1292
        %1295 = vset.pattern.permute.xlu0 3
        %1296 = vperm.xlu0 %1295, %v457
        %v1297 = vpop.permute.xlu0 %1296
        %1299 = vset.pattern.permute.xlu0 3
        %1300 = vperm.xlu0 %1299, %v458
        %v1301 = vpop.permute.xlu0 %1300
        %1303 = vset.pattern.permute.xlu0 3
        %1304 = vperm.xlu0 %1303, %v459
        %v1305 = vpop.permute.xlu0 %1304
        %1307 = vset.pattern.permute.xlu0 3
        %1308 = vperm.xlu0 %1307, %v460
        %v1309 = vpop.permute.xlu0 %1308
        %1311 = vset.pattern.permute.xlu0 3
        %1312 = vperm.xlu0 %1311, %v461
        %v1313 = vpop.permute.xlu0 %1312
        %v1315 = vmul.f32 %v368, %v1253
        %v1316 = vmul.f32 %v371, %v1257
        %v1317 = vmul.f32 %v376, %v1261
        %v1318 = vmul.f32 %v379, %v1265
        %v1319 = vmul.f32 %v384, %v1269
        %v1320 = vmul.f32 %v387, %v1273
        %v1321 = vmul.f32 %v392, %v1277
        %v1322 = vmul.f32 %v395, %v1281
        %v1323 = vmul.f32 %v400, %v1285
        %v1324 = vmul.f32 %v403, %v1289
        %v1325 = vmul.f32 %v408, %v1293
        %v1326 = vmul.f32 %v411, %v1297
        %v1327 = vmul.f32 %v416, %v1301
        %v1328 = vmul.f32 %v419, %v1305
        %v1329 = vmul.f32 %v424, %v1309
        %v1330 = vmul.f32 %v427, %v1313
        %v1331 = vpack.c.bf16 %v1316, %v1315
        %v1332 = vpack.c.bf16 %v1318, %v1317
        %v1333 = vpack.c.bf16 %v1320, %v1319
        %v1334 = vpack.c.bf16 %v1322, %v1321
        %v1335 = vpack.c.bf16 %v1324, %v1323
        %v1336 = vpack.c.bf16 %v1326, %v1325
        %v1337 = vpack.c.bf16 %v1328, %v1327
        %v1338 = vpack.c.bf16 %v1330, %v1329
        %v1339 = vtanh.bf16.pop %v1331
        %v1340 = vtanh.bf16.pop %v1332
        %v1341 = vtanh.bf16.pop %v1333
        %v1342 = vtanh.bf16.pop %v1334
        %v1343 = vtanh.bf16.pop %v1335
        %v1344 = vtanh.bf16.pop %v1336
        %v1345 = vtanh.bf16.pop %v1337
        %v1346 = vtanh.bf16.pop %v1338
        %1347 = vmatprep.subr.bf16.mxu0 0
        %1348 = vmatpush1.bf16.msra.mxu0 %v1346
        %1349 = vmatprep.subr.bf16.mxu0 0
        %1350 = vmatpush1.bf16.msra.mxu0 %v1345
        %1351 = vmatprep.subr.bf16.mxu0 0
        %1352 = vmatpush1.bf16.msra.mxu0 %v1344
        %1353 = vmatprep.subr.bf16.mxu0 0
        %1354 = vmatpush1.bf16.msra.mxu0 %v1343
        %1355 = vmatprep.subr.bf16.mxu0 0
        %1356 = vmatpush1.bf16.msra.mxu0 %v1342
        %1357 = vmatprep.subr.bf16.mxu0 0
        %1358 = vmatpush1.bf16.msra.mxu0 %v1341
        %1359 = vmatprep.subr.bf16.mxu0 0
        %1360 = vmatpush1.bf16.msra.mxu0 %v1340
        %1361 = vmatprep.subr.bf16.mxu0 0
        %1362 = vmatpush1.bf16.msra.mxu0 %v1339
        %1363 = vmatprep.subr.bf16.mxu0 0
        %1364 = vmatpush2.bf16.msra.mxu0 0
        %1365 = vmatprep.subr.bf16.mxu0 0
        %1366 = vmatpush2.bf16.msra.mxu0 0
        %1367 = vmatprep.subr.bf16.mxu0 0
        %1368 = vmatpush2.bf16.msra.mxu0 0
        %1369 = vmatprep.subr.bf16.mxu0 0
        %1370 = vmatpush2.bf16.msra.mxu0 0
        %1371 = vmatprep.subr.bf16.mxu0 0
        %1372 = vmatpush2.bf16.msra.mxu0 0
        %1373 = vmatprep.subr.bf16.mxu0 0
        %1374 = vmatpush2.bf16.msra.mxu0 0
        %1375 = vmatprep.subr.bf16.mxu0 0
        %1376 = vmatpush2.bf16.msra.mxu0 0
        %1377 = vmatprep.subr.bf16.mxu0 0
        %1378 = vmatpush2.bf16.msra.mxu0 0
        %1379 = vmatprep.mubr.bf16.mxu0 0
        %1380 = vmatmul.mubr.bf16.gmra.mxu0 %v702
        %v1381 = vpop.f32.mrf.mxu0
        %v1382 = vadd.f32 %v481, %v1381
        %v1383 = vpop.f32.mrf.mxu0
        %v1384 = vpop.f32.mrf.mxu0
        %v1385 = vadd.f32 %v486, %v1384
        %v1386 = vpop.f32.mrf.mxu0
        %1387 = vmatprep.mubr.bf16.mxu0 0
        %1388 = vmatmul.mubr.bf16.gmra.mxu0 %v703
        %v1389 = vpop.f32.mrf.mxu0
        %v1390 = vadd.f32 %v491, %v1389
        %v1391 = vpop.f32.mrf.mxu0
        %v1392 = vpop.f32.mrf.mxu0
        %v1393 = vadd.f32 %v496, %v1392
        %v1394 = vpop.f32.mrf.mxu0
        %1395 = vmatprep.mubr.bf16.mxu0 0
        %1396 = vmatmul.mubr.bf16.gmra.mxu0 %v704
        %v1397 = vpop.f32.mrf.mxu0
        %v1398 = vadd.f32 %v501, %v1397
        %v1399 = vpop.f32.mrf.mxu0
        %v1400 = vpop.f32.mrf.mxu0
        %v1401 = vadd.f32 %v506, %v1400
        %v1402 = vpop.f32.mrf.mxu0
        %1403 = vmatprep.mubr.bf16.mxu0 0
        %1404 = vmatmul.mubr.bf16.gmra.mxu0 %v705
        %v1405 = vpop.f32.mrf.mxu0
        %v1406 = vadd.f32 %v511, %v1405
        %v1407 = vpop.f32.mrf.mxu0
        %v1408 = vpop.f32.mrf.mxu0
        %v1409 = vadd.f32 %v516, %v1408
        %v1410 = vpop.f32.mrf.mxu0
        %1411 = vmatprep.mubr.bf16.mxu0 0
        %1412 = vmatmul.mubr.bf16.gmra.mxu0 %v706
        %v1413 = vpop.f32.mrf.mxu0
        %v1414 = vadd.f32 %v521, %v1413
        %v1415 = vpop.f32.mrf.mxu0
        %v1416 = vpop.f32.mrf.mxu0
        %v1417 = vadd.f32 %v526, %v1416
        %v1418 = vpop.f32.mrf.mxu0
        %1419 = vmatprep.mubr.bf16.mxu0 0
        %1420 = vmatmul.mubr.bf16.gmra.mxu0 %v707
        %v1421 = vpop.f32.mrf.mxu0
        %v1422 = vadd.f32 %v531, %v1421
        %v1423 = vpop.f32.mrf.mxu0
        %v1424 = vpop.f32.mrf.mxu0
        %v1425 = vadd.f32 %v536, %v1424
        %v1426 = vpop.f32.mrf.mxu0
        %1427 = vmatprep.mubr.bf16.mxu0 0
        %1428 = vmatmul.mubr.bf16.gmra.mxu0 %v708
        %v1429 = vpop.f32.mrf.mxu0
        %v1430 = vadd.f32 %v541, %v1429
        %v1431 = vpop.f32.mrf.mxu0
        %v1432 = vpop.f32.mrf.mxu0
        %v1433 = vadd.f32 %v546, %v1432
        %v1434 = vpop.f32.mrf.mxu0
        %1435 = vmatprep.mubr.bf16.mxu0 0
        %1436 = vmatmul.mubr.bf16.gmra.mxu0 %v709
        %v1437 = vpop.f32.mrf.mxu0
        %v1438 = vadd.f32 %v551, %v1437
        %v1439 = vpop.f32.mrf.mxu0
        %v1440 = vpop.f32.mrf.mxu0
        %v1441 = vadd.f32 %v556, %v1440
        %v1442 = vpop.f32.mrf.mxu0
        %1443 = vdwg.mxu0
        %s1444 = scalar_lea.vmem %s237, 384 [#allocation2]
        %1445 = vst [vmem:[%s1444] sm:$0xff] %v1382
        %1446 = vst [vmem:[%s1444 + $0x8] sm:$0xff] %v1385
        %1447 = vst [vmem:[%s1444 + $0x10] sm:$0xff] %v1390
        %1448 = vst [vmem:[%s1444 + $0x18] sm:$0xff] %v1393
        %1449 = vst [vmem:[%s1444 + $0x20] sm:$0xff] %v1398
        %1450 = vst [vmem:[%s1444 + $0x28] sm:$0xff] %v1401
        %1451 = vst [vmem:[%s1444 + $0x30] sm:$0xff] %v1406
        %1452 = vst [vmem:[%s1444 + $0x38] sm:$0xff] %v1409
        %1453 = vst [vmem:[%s1444 + $0x40] sm:$0xff] %v1414
        %1454 = vst [vmem:[%s1444 + $0x48] sm:$0xff] %v1417
        %1455 = vst [vmem:[%s1444 + $0x50] sm:$0xff] %v1422
        %1456 = vst [vmem:[%s1444 + $0x58] sm:$0xff] %v1425
        %1457 = vst [vmem:[%s1444 + $0x60] sm:$0xff] %v1430
        %1458 = vst [vmem:[%s1444 + $0x68] sm:$0xff] %v1433
        %1459 = vst [vmem:[%s1444 + $0x70] sm:$0xff] %v1438
        %1460 = vst [vmem:[%s1444 + $0x78] sm:$0xff] %v1441
        %s1461 = sand.u32 %s153, 1
        %s1462 = scalar_lea.sflag [#allocation3], %s1461
        %s1463 = sand.u32 %s153, 1
        %s1464 = smul.addr %s1463, 512
        %s1465 = scalar_lea.vmem [#allocation2], %s1464
        // Predicated region
        $region41: #{tpu_custom_call.1} parent=39 // pred_check
          %p1466 = pneg %p163
        $region42: #{tpu_custom_call.1} parent=39 // pred_check_branch
          %1468 = sbr.rel (%p1466) target = $region44
        $region43: #{tpu_custom_call.1} parent=39 // pred_region
          %s1470 = ssub.s32 8192, 8192
          %1471 = vsyncadd %s1462, %s1470
          %s1472 = smul.addr %s23, 64
          %s1473 = sadd.s32 %s24, %s1472
          %s1474 = smul.addr %s1473, 128
          %s1475 = scalar_lea.hbm %s5, %s1474
          %s1476 = sshll.u32 %s1465, 4
          %s1477 = int_to_ptr.vmem [resolvable:$true] %s1476
          %1482 = dma.vmem_to_hbm [thread:$0]  %s1477, 8192, %s1475, %s1462, 128, 128, 8
        $region44: #{tpu_custom_call.1} parent=39 // pred_fallthru
          _
      $region40: #{tpu_custom_call.1} parent=5 // pred_fallthru
        _
      %p1483 = scmp.le.s32.totalorder 2, %s14
      // Predicated region
      $region45: #{tpu_custom_call.1} parent=5 // pred_check
        %p1484 = pneg %p1483
      $region46: #{tpu_custom_call.1} parent=5 // pred_check_branch
        %1486 = sbr.rel (%p1484) target = $region48
      $region47: #{tpu_custom_call.1} parent=5 // pred_region
        %s1487 = ssub.s32 %s14, 2
        // Predicated region
        $region49: #{tpu_custom_call.1} parent=47 // pred_check
          %p1488 = pneg %p169
        $region50: #{tpu_custom_call.1} parent=47 // pred_check_branch
          %1490 = sbr.rel (%p1488) target = $region52
        $region51: #{tpu_custom_call.1} parent=47 // pred_region
          %s1491 = sand.u32 %s154, 1
          %s1492 = scalar_lea.sflag [#allocation3], %s1491
          %s1493 = sand.u32 %s154, 1
          %s1494 = smul.addr %s1493, 512
          %s1495 = scalar_lea.vmem [#allocation2], %s1494
          %1496 = dma.done %s1492, 8192
        $region52: #{tpu_custom_call.1} parent=47 // pred_fallthru
          _
      $region48: #{tpu_custom_call.1} parent=5 // pred_fallthru
        _
    $region6: #{tpu_custom_call.1} parent=1 // loop_footer
      %s18 = sadd.s32 1, %s14
    $region7: #{tpu_custom_call.1} parent=1 // loop_footer_branch
      %13 = sbr.rel target = $region3
    $region8: #{tpu_custom_call.1} parent=1 // loop_exit
      _
    %1497 = vsyncpa [#allocation3], 1
    %s1498 = scalar_lea.sflag [#allocation3], 1
    %1499 = vsyncpa %s1498, 1

// kernel: tpu_custom_call.1
$region0: #{tpu_custom_call.1}
  #allocation0 [shape = 'u32[]', space=smem, size = 0x4, offset = 0x4, fixed_abs, tag = 'smem constant byte address 0x4 - core index']
  #allocation1 [shape = 'u32[144,128]{1,0:T(1,128)}', space=vmem, size = 0x12000, scoped, tag = 'internal scratch']
  %s0 = inlined_call_operand.vmem [shape: f32[2,8,128], index: 0, kind: input, shape index: {}]
  %s1 = inlined_call_operand.vmem [shape: bf16[128,8], index: 1, kind: input, shape index: {}]
  %s2 = inlined_call_operand.vmem [shape: f32[128,4], index: 2, kind: input, shape index: {}]
  %s3 = inlined_call_operand.vmem [shape: bf16[128,128], index: 3, kind: input, shape index: {}]
  %s4 = inlined_call_operand.vmem [shape: f32[128,1], index: 4, kind: input, shape index: {}]
  %s5 = inlined_call_operand.hbm [shape: f32[2,4,128,128], index: 5, kind: output, shape index: {}]
  %s6 = sld [smem:[#allocation0]]
  $region53: #{tpu_custom_call.1} parent=0
    _
  %s8 = ssub.s32 1, %s6
  %s9 = scalar_select 0, %s8, %s6
  $region1: #{tpu_custom_call.1} parent=0
    #allocation2 [shape = 'u8[524288]{0}', space=vmem, size = 0x80000, scoped, tag = 'output window, operand 0']
    #allocation3 [shape = 's32[2]{0}', space=sflag, size = 0x8, scoped, tag = 'scoped memory for tpu_custom_call.1']
    %10 = vsyncpa [#allocation3], 0
    %s11 = scalar_lea.sflag [#allocation3], 1
    %12 = vsyncpa %s11, 0
    loop: start=0, step=1, limit=4
    $region2: #{tpu_custom_call.1} parent=1 // loop_pre_header
      _
    $region3: #{tpu_custom_call.1} parent=1 // loop_header
      %s14 = sphi 0, %s18
      %p15 = scmp.ge.s32.totalorder %s14, 4
      %s21 = sphi 0, %s33
      %s22 = sphi 0, %s29
      %s23 = sphi 0, %s21
      %s24 = sphi 0, %s22
      %s25 = sphi 0, %s23
      %s26 = sphi 0, %s24
      %s38 = sphi 0, %s40
      %s41 = sphi 0, %s38
      %s42 = sphi 0, %s41
      %s58 = sphi 0, %s42
      %s62 = sphi 0, %s62
      %s64 = sphi 0, %s62
      %s65 = sphi 0, %s64
      %s79 = sphi 0, %s65
      %s83 = sphi 0, %s83
      %s85 = sphi 0, %s83
      %s86 = sphi 0, %s85
      %s100 = sphi 0, %s86
      %s104 = sphi 0, %s104
      %s106 = sphi 0, %s104
      %s107 = sphi 0, %s106
      %s121 = sphi 0, %s107
      %s125 = sphi 0, %s125
      %s127 = sphi 0, %s125
      %s128 = sphi 0, %s127
      %s142 = sphi 0, %s128
      %s150 = sphi 0, %s152
      %s153 = sphi 0, %s150
      %s154 = sphi 0, %s153
      %s170 = sphi 0, %s154
    $region4: #{tpu_custom_call.1} parent=1 // loop_header_branch
      %17 = sbr.rel (%p15) target = $region8
    $region5: #{tpu_custom_call.1} parent=1 // loop_body
      %s19 = ssub.s32 %s14, 1
      %s20 = ssub.s32 %s14, 2
      %s27 = sadd.s32 1, %s22
      %p28 = scmp.ge.s32.totalorder %s27, 1
      %s29 = scalar_select %p28, 0, %s27
      %s30 = sadd.s32 1, %s21
      %s31 = scalar_select %p28, %s30, %s21
      %p32 = scmp.ge.s32.totalorder %s31, 2
      %s33 = scalar_select %p32, 0, %s31
      %s34 = ssub.s32 %s21, %s33
      %s35 = ssub.s32 %s22, %s29
      %s36 = sor.u32 %s34, %s35
      %p37 = scmp.eq.s32.totalorder %s36, 0
      %s39 = sadd.s32 %s38, 1
      %s40 = scalar_select %p37, %s38, %s39
      %p43 = pneg %p37
      %p44 = scmp.eq.s32.totalorder %s14, 1
      %p45 = por %p43, %p44
      %p46 = scmp.ne.s32.totalorder %s38, %s41
      %p47 = scmp.eq.s32.totalorder %s14, 0
      %p48 = por %p46, %p47
      %p49 = scmp.ne.s32.totalorder %s38, %s41
      %p50 = scmp.eq.s32.totalorder %s19, 1
      %p51 = por %p49, %p50
      %p52 = scmp.ne.s32.totalorder %s41, %s42
      %p53 = scmp.eq.s32.totalorder %s19, 0
      %p54 = por %p52, %p53
      %p55 = scmp.ne.s32.totalorder %s41, %s42
      %p56 = scmp.eq.s32.totalorder %s20, 1
      %p57 = por %p55, %p56
      %p59 = scmp.ne.s32.totalorder %s42, %s58
      %p60 = scmp.eq.s32.totalorder %s20, 0
      %p61 = por %p59, %p60
      %s63 = sadd.s32 %s62, 1
      %p66 = scmp.eq.s32.totalorder %s14, 1
      %p67 = scmp.ne.s32.totalorder %s62, %s64
      %p68 = scmp.eq.s32.totalorder %s14, 0
      %p69 = por %p67, %p68
      %p70 = scmp.ne.s32.totalorder %s62, %s64
      %p71 = scmp.eq.s32.totalorder %s19, 1
      %p72 = por %p70, %p71
      %p73 = scmp.ne.s32.totalorder %s64, %s65
      %p74 = scmp.eq.s32.totalorder %s19, 0
      %p75 = por %p73, %p74
      %p76 = scmp.ne.s32.totalorder %s64, %s65
      %p77 = scmp.eq.s32.totalorder %s20, 1
      %p78 = por %p76, %p77
      %p80 = scmp.ne.s32.totalorder %s65, %s79
      %p81 = scmp.eq.s32.totalorder %s20, 0
      %p82 = por %p80, %p81
      %s84 = sadd.s32 %s83, 1
      %p87 = scmp.eq.s32.totalorder %s14, 1
      %p88 = scmp.ne.s32.totalorder %s83, %s85
      %p89 = scmp.eq.s32.totalorder %s14, 0
      %p90 = por %p88, %p89
      %p91 = scmp.ne.s32.totalorder %s83, %s85
      %p92 = scmp.eq.s32.totalorder %s19, 1
      %p93 = por %p91, %p92
      %p94 = scmp.ne.s32.totalorder %s85, %s86
      %p95 = scmp.eq.s32.totalorder %s19, 0
      %p96 = por %p94, %p95
      %p97 = scmp.ne.s32.totalorder %s85, %s86
      %p98 = scmp.eq.s32.totalorder %s20, 1
      %p99 = por %p97, %p98
      %p101 = scmp.ne.s32.totalorder %s86, %s100
      %p102 = scmp.eq.s32.totalorder %s20, 0
      %p103 = por %p101, %p102
      %s105 = sadd.s32 %s104, 1
      %p108 = scmp.eq.s32.totalorder %s14, 1
      %p109 = scmp.ne.s32.totalorder %s104, %s106
      %p110 = scmp.eq.s32.totalorder %s14, 0
      %p111 = por %p109, %p110
      %p112 = scmp.ne.s32.totalorder %s104, %s106
      %p113 = scmp.eq.s32.totalorder %s19, 1
      %p114 = por %p112, %p113
      %p115 = scmp.ne.s32.totalorder %s106, %s107
      %p116 = scmp.eq.s32.totalorder %s19, 0
      %p117 = por %p115, %p116
      %p118 = scmp.ne.s32.totalorder %s106, %s107
      %p119 = scmp.eq.s32.totalorder %s20, 1
      %p120 = por %p118, %p119
      %p122 = scmp.ne.s32.totalorder %s107, %s121
      %p123 = scmp.eq.s32.totalorder %s20, 0
      %p124 = por %p122, %p123
      %s126 = sadd.s32 %s125, 1
      %p129 = scmp.eq.s32.totalorder %s14, 1
      %p130 = scmp.ne.s32.totalorder %s125, %s127
      %p131 = scmp.eq.s32.totalorder %s14, 0
      %p132 = por %p130, %p131
      %p133 = scmp.ne.s32.totalorder %s125, %s127
      %p134 = scmp.eq.s32.totalorder %s19, 1
      %p135 = por %p133, %p134
      %p136 = scmp.ne.s32.totalorder %s127, %s128
      %p137 = scmp.eq.s32.totalorder %s19, 0
      %p138 = por %p136, %p137
      %p139 = scmp.ne.s32.totalorder %s127, %s128
      %p140 = scmp.eq.s32.totalorder %s20, 1
      %p141 = por %p139, %p140
      %p143 = scmp.ne.s32.totalorder %s128, %s142
      %p144 = scmp.eq.s32.totalorder %s20, 0
      %p145 = por %p143, %p144
      %s146 = ssub.s32 %s21, %s33
      %s147 = ssub.s32 %s22, %s29
      %s148 = sor.u32 %s146, %s147
      %p149 = scmp.eq.s32.totalorder %s148, 0
      %s151 = sadd.s32 %s150, 1
      %s152 = scalar_select %p149, %s150, %s151
      %p155 = pneg %p149
      %p156 = scmp.eq.s32.totalorder %s14, 1
      %p157 = por %p155, %p156
      %p158 = scmp.ne.s32.totalorder %s150, %s153
      %p159 = scmp.eq.s32.totalorder %s14, 0
      %p160 = por %p158, %p159
      %p161 = scmp.ne.s32.totalorder %s150, %s153
      %p162 = scmp.eq.s32.totalorder %s19, 1
      %p163 = por %p161, %p162
      %p164 = scmp.ne.s32.totalorder %s153, %s154
      %p165 = scmp.eq.s32.totalorder %s19, 0
      %p166 = por %p164, %p165
      %p167 = scmp.ne.s32.totalorder %s153, %s154
      %p168 = scmp.eq.s32.totalorder %s20, 1
      %p169 = por %p167, %p168
      %p171 = scmp.ne.s32.totalorder %s154, %s170
      %p172 = scmp.eq.s32.totalorder %s20, 0
      %p173 = por %p171, %p172
      %p174 = scmp.le.s32.totalorder 1, %s14
      %p175 = scmp.lt.s32.totalorder %s14, 3
      %p176 = pnand %p174, %p175
      %p177 = pneg %p176
      // Predicated region
      $region9: #{tpu_custom_call.1} parent=5 // pred_check
        _
      $region10: #{tpu_custom_call.1} parent=5 // pred_check_branch
        %179 = sbr.rel (%p176) target = $region12
      $region11: #{tpu_custom_call.1} parent=5 // pred_region
        %s180 = ssub.s32 %s14, 1
        // Predicated region
        $region13: #{tpu_custom_call.1} parent=11 // pred_check
          %p181 = pneg %p75
        $region14: #{tpu_custom_call.1} parent=11 // pred_check_branch
          %183 = sbr.rel (%p181) target = $region16
        $region15: #{tpu_custom_call.1} parent=11 // pred_region
          _
        $region16: #{tpu_custom_call.1} parent=11 // pred_fallthru
          _
        // Predicated region
        $region17: #{tpu_custom_call.1} parent=11 // pred_check
          %p184 = pneg %p96
        $region18: #{tpu_custom_call.1} parent=11 // pred_check_branch
          %186 = sbr.rel (%p184) target = $region20
        $region19: #{tpu_custom_call.1} parent=11 // pred_region
          _
        $region20: #{tpu_custom_call.1} parent=11 // pred_fallthru
          _
        // Predicated region
        $region21: #{tpu_custom_call.1} parent=11 // pred_check
          %p187 = pneg %p117
        $region22: #{tpu_custom_call.1} parent=11 // pred_check_branch
          %189 = sbr.rel (%p187) target = $region24
        $region23: #{tpu_custom_call.1} parent=11 // pred_region
          _
        $region24: #{tpu_custom_call.1} parent=11 // pred_fallthru
          _
        // Predicated region
        $region25: #{tpu_custom_call.1} parent=11 // pred_check
          %p190 = pneg %p138
        $region26: #{tpu_custom_call.1} parent=11 // pred_check_branch
          %192 = sbr.rel (%p190) target = $region28
        $region27: #{tpu_custom_call.1} parent=11 // pred_region
          _
        $region28: #{tpu_custom_call.1} parent=11 // pred_fallthru
          _
      $region12: #{tpu_custom_call.1} parent=5 // pred_fallthru
        _
      %p193 = scmp.lt.s32.totalorder %s14, 2
      // Predicated region
      $region29: #{tpu_custom_call.1} parent=5 // pred_check
        %p194 = pneg %p193
      $region30: #{tpu_custom_call.1} parent=5 // pred_check_branch
        %196 = sbr.rel (%p194) target = $region32
      $region31: #{tpu_custom_call.1} parent=5 // pred_region
        // Predicated region
        $region33: #{tpu_custom_call.1} parent=31 // pred_check
          %p197 = pneg %p48
        $region34: #{tpu_custom_call.1} parent=31 // pred_check_branch
          %199 = sbr.rel (%p197) target = $region36
        $region35: #{tpu_custom_call.1} parent=31 // pred_region
          %p200 = scmp.lt.s32.totalorder %s21, 1
          %s201 = scalar_select %p200, %s21, 1
          %p202 = scmp.lt.s32.totalorder %s22, 0
          %s203 = scalar_select %p202, %s22, 0
          %s204 = sadd.s32 %s203, %s201
          %s205 = smul.addr %s204, 8
          %s206 = scalar_lea.vmem %s0, %s205
        $region36: #{tpu_custom_call.1} parent=31 // pred_fallthru
          _
      $region32: #{tpu_custom_call.1} parent=5 // pred_fallthru
        _
      %p207 = scmp.le.s32.totalorder 1, %s14
      %p208 = scmp.lt.s32.totalorder %s14, 3
      %p209 = pnand %p207, %p208
      %p210 = pneg %p209
      // Predicated region
      $region37: #{tpu_custom_call.1} parent=5 // pred_check
        _
      $region38: #{tpu_custom_call.1} parent=5 // pred_check_branch
        %212 = sbr.rel (%p209) target = $region40
      $region39: #{tpu_custom_call.1} parent=5 // pred_region
        %s213 = ssub.s32 %s14, 1
        %p214 = scmp.lt.s32.totalorder %s23, 1
        %s215 = scalar_select %p214, %s23, 1
        %p216 = scmp.lt.s32.totalorder %s24, 0
        %s217 = scalar_select %p216, %s24, 0
        %s218 = sadd.s32 %s217, %s215
        %s219 = smul.addr %s218, 8
        %s220 = scalar_lea.vmem %s0, %s219
        %p221 = pneg %p54
        %p222 = pneg %p51
        %p223 = pneg %p75
        %p224 = pneg %p72
        %p225 = pneg %p96
        %p226 = pneg %p93
        %p227 = pneg %p117
        %p228 = pneg %p114
        %p229 = pneg %p138
        %p230 = pneg %p135
        %p231 = pneg %p166
        %p232 = pneg %p163
        %s233 = sand.u32 %s153, 1
        %s234 = scalar_lea.sflag [#allocation3], %s233
        %s235 = sand.u32 %s153, 1
        %s236 = smul.addr %s235, 512
        %s237 = scalar_lea.vmem [#allocation2], %s236
        %p238 = scmp.lt.s32.totalorder %s23, 1
        %s239 = scalar_select %p238, %s23, 1
        %p240 = scmp.lt.s32.totalorder %s24, 0
        %s241 = scalar_select %p240, %s24, 0
        %s242 = sadd.s32 %s241, %s239
        %s243 = smul.addr %s242, 8
        %s244 = scalar_lea.vmem %s0, %s243
        %v246 = vld [vmem:[%s244] sm:$0xff]
        %v247 = vpack.c.bf16 %v246, %v246
        %v248 = vld [vmem:[%s1] sm:$0xf]
        %v249 = vld [vmem:[%s1 + $0x4] sm:$0xf]
        %v250 = vld [vmem:[%s1 + $0x8] sm:$0xf]
        %v251 = vld [vmem:[%s1 + $0xc] sm:$0xf]
        %v252 = vld [vmem:[%s1 + $0x10] sm:$0xf]
        %v253 = vld [vmem:[%s1 + $0x14] sm:$0xf]
        %v254 = vld [vmem:[%s1 + $0x18] sm:$0xf]
        %v255 = vld [vmem:[%s1 + $0x1c] sm:$0xf]
        %v256 = vld [vmem:[%s1 + $0x20] sm:$0xf]
        %v257 = vld [vmem:[%s1 + $0x24] sm:$0xf]
        %v258 = vld [vmem:[%s1 + $0x28] sm:$0xf]
        %v259 = vld [vmem:[%s1 + $0x2c] sm:$0xf]
        %v260 = vld [vmem:[%s1 + $0x30] sm:$0xf]
        %v261 = vld [vmem:[%s1 + $0x34] sm:$0xf]
        %v262 = vld [vmem:[%s1 + $0x38] sm:$0xf]
        %v263 = vld [vmem:[%s1 + $0x3c] sm:$0xf]
        %v280 = vunpack.c.l.b16 %v248
        %v281 = vunpack.c.l.b16 %v249
        %v282 = vunpack.c.l.b16 %v250
        %v283 = vunpack.c.l.b16 %v251
        %v284 = vunpack.c.l.b16 %v252
        %v285 = vunpack.c.l.b16 %v253
        %v286 = vunpack.c.l.b16 %v254
        %v287 = vunpack.c.l.b16 %v255
        %v288 = vunpack.c.l.b16 %v256
        %v289 = vunpack.c.l.b16 %v257
        %v290 = vunpack.c.l.b16 %v258
        %v291 = vunpack.c.l.b16 %v259
        %v292 = vunpack.c.l.b16 %v260
        %v293 = vunpack.c.l.b16 %v261
        %v294 = vunpack.c.l.b16 %v262
        %v295 = vunpack.c.l.b16 %v263
        %v296 = vpack.c.b16 %v281, %v280
        %v297 = vpack.c.b16 %v283, %v282
        %v298 = vpack.c.b16 %v285, %v284
        %v299 = vpack.c.b16 %v287, %v286
        %v300 = vpack.c.b16 %v289, %v288
        %v301 = vpack.c.b16 %v291, %v290
        %v302 = vpack.c.b16 %v293, %v292
        %v303 = vpack.c.b16 %v295, %v294
        %vm304 = vcmask 64512
        %v306 = vsel %vm304, %v296, 0
        %v309 = vsel %vm304, %v297, 0
        %v312 = vsel %vm304, %v298, 0
        %v315 = vsel %vm304, %v299, 0
        %v318 = vsel %vm304, %v300, 0
        %v321 = vsel %vm304, %v301, 0
        %v324 = vsel %vm304, %v302, 0
        %v327 = vsel %vm304, %v303, 0
        %vm329 = vcmask 1043456
        %v331 = vsel %vm329, %v247, 0
        %333 = vmatprep.subr.bf16.mxu0 0
        %334 = vmatpush1.bf16.msra.mxu0 0
        %335 = vmatprep.subr.bf16.mxu0 0
        %336 = vmatpush1.bf16.msra.mxu0 0
        %337 = vmatprep.subr.bf16.mxu0 0
        %338 = vmatpush1.bf16.msra.mxu0 0
        %339 = vmatprep.subr.bf16.mxu0 0
        %340 = vmatpush1.bf16.msra.mxu0 0
        %341 = vmatprep.subr.bf16.mxu0 0
        %342 = vmatpush1.bf16.msra.mxu0 0
        %343 = vmatprep.subr.bf16.mxu0 0
        %344 = vmatpush1.bf16.msra.mxu0 0
        %345 = vmatprep.subr.bf16.mxu0 0
        %346 = vmatpush1.bf16.msra.mxu0 0
        %347 = vmatprep.subr.bf16.mxu0 0
        %348 = vmatpush1.bf16.msra.mxu0 %v331
        %349 = vmatprep.subr.bf16.mxu0 0
        %350 = vmatpush2.bf16.msra.mxu0 0
        %351 = vmatprep.subr.bf16.mxu0 0
        %352 = vmatpush2.bf16.msra.mxu0 0
        %353 = vmatprep.subr.bf16.mxu0 0
        %354 = vmatpush2.bf16.msra.mxu0 0
        %355 = vmatprep.subr.bf16.mxu0 0
        %356 = vmatpush2.bf16.msra.mxu0 0
        %357 = vmatprep.subr.bf16.mxu0 0
        %358 = vmatpush2.bf16.msra.mxu0 0
        %359 = vmatprep.subr.bf16.mxu0 0
        %360 = vmatpush2.bf16.msra.mxu0 0
        %361 = vmatprep.subr.bf16.mxu0 0
        %362 = vmatpush2.bf16.msra.mxu0 0
        %363 = vmatprep.subr.bf16.mxu0 0
        %364 = vmatpush2.bf16.msra.mxu0 0
        %365 = vmatprep.mubr.bf16.mxu0 0
        %366 = vmatmul.mubr.bf16.gmra.mxu0 %v306
        %v367 = vpop.f32.mrf.mxu0
        %v368 = vadd.f32 0.0, %v367
        %v369 = vpop.f32.mrf.mxu0
        %v370 = vpop.f32.mrf.mxu0
        %v371 = vadd.f32 0.0, %v370
        %v372 = vpop.f32.mrf.mxu0
        %373 = vmatprep.mubr.bf16.mxu0 0
        %374 = vmatmul.mubr.bf16.gmra.mxu0 %v309
        %v375 = vpop.f32.mrf.mxu0
        %v376 = vadd.f32 0.0, %v375
        %v377 = vpop.f32.mrf.mxu0
        %v378 = vpop.f32.mrf.mxu0
        %v379 = vadd.f32 0.0, %v378
        %v380 = vpop.f32.mrf.mxu0
        %381 = vmatprep.mubr.bf16.mxu0 0
        %382 = vmatmul.mubr.bf16.gmra.mxu0 %v312
        %v383 = vpop.f32.mrf.mxu0
        %v384 = vadd.f32 0.0, %v383
        %v385 = vpop.f32.mrf.mxu0
        %v386 = vpop.f32.mrf.mxu0
        %v387 = vadd.f32 0.0, %v386
        %v388 = vpop.f32.mrf.mxu0
        %389 = vmatprep.mubr.bf16.mxu0 0
        %390 = vmatmul.mubr.bf16.gmra.mxu0 %v315
        %v391 = vpop.f32.mrf.mxu0
        %v392 = vadd.f32 0.0, %v391
        %v393 = vpop.f32.mrf.mxu0
        %v394 = vpop.f32.mrf.mxu0
        %v395 = vadd.f32 0.0, %v394
        %v396 = vpop.f32.mrf.mxu0
        %397 = vmatprep.mubr.bf16.mxu0 0
        %398 = vmatmul.mubr.bf16.gmra.mxu0 %v318
        %v399 = vpop.f32.mrf.mxu0
        %v400 = vadd.f32 0.0, %v399
        %v401 = vpop.f32.mrf.mxu0
        %v402 = vpop.f32.mrf.mxu0
        %v403 = vadd.f32 0.0, %v402
        %v404 = vpop.f32.mrf.mxu0
        %405 = vmatprep.mubr.bf16.mxu0 0
        %406 = vmatmul.mubr.bf16.gmra.mxu0 %v321
        %v407 = vpop.f32.mrf.mxu0
        %v408 = vadd.f32 0.0, %v407
        %v409 = vpop.f32.mrf.mxu0
        %v410 = vpop.f32.mrf.mxu0
        %v411 = vadd.f32 0.0, %v410
        %v412 = vpop.f32.mrf.mxu0
        %413 = vmatprep.mubr.bf16.mxu0 0
        %414 = vmatmul.mubr.bf16.gmra.mxu0 %v324
        %v415 = vpop.f32.mrf.mxu0
        %v416 = vadd.f32 0.0, %v415
        %v417 = vpop.f32.mrf.mxu0
        %v418 = vpop.f32.mrf.mxu0
        %v419 = vadd.f32 0.0, %v418
        %v420 = vpop.f32.mrf.mxu0
        %421 = vmatprep.mubr.bf16.mxu0 0
        %422 = vmatmul.mubr.bf16.gmra.mxu0 %v327
        %v423 = vpop.f32.mrf.mxu0
        %v424 = vadd.f32 0.0, %v423
        %v425 = vpop.f32.mrf.mxu0
        %v426 = vpop.f32.mrf.mxu0
        %v427 = vadd.f32 0.0, %v426
        %v428 = vpop.f32.mrf.mxu0
        %429 = vdwg.mxu0
        %v430 = vld [vmem:[%s3] sm:$0xf]
        %v431 = vld [vmem:[%s3 + $0x4] sm:$0xf]
        %v432 = vld [vmem:[%s3 + $0x8] sm:$0xf]
        %v433 = vld [vmem:[%s3 + $0xc] sm:$0xf]
        %v434 = vld [vmem:[%s3 + $0x10] sm:$0xf]
        %v435 = vld [vmem:[%s3 + $0x14] sm:$0xf]
        %v436 = vld [vmem:[%s3 + $0x18] sm:$0xf]
        %v437 = vld [vmem:[%s3 + $0x1c] sm:$0xf]
        %v438 = vld [vmem:[%s3 + $0x20] sm:$0xf]
        %v439 = vld [vmem:[%s3 + $0x24] sm:$0xf]
        %v440 = vld [vmem:[%s3 + $0x28] sm:$0xf]
        %v441 = vld [vmem:[%s3 + $0x2c] sm:$0xf]
        %v442 = vld [vmem:[%s3 + $0x30] sm:$0xf]
        %v443 = vld [vmem:[%s3 + $0x34] sm:$0xf]
        %v444 = vld [vmem:[%s3 + $0x38] sm:$0xf]
        %v445 = vld [vmem:[%s3 + $0x3c] sm:$0xf]
        %v446 = vld [vmem:[%s2] sm:$0xff]
        %v447 = vld [vmem:[%s2 + $0x8] sm:$0xff]
        %v448 = vld [vmem:[%s2 + $0x10] sm:$0xff]
        %v449 = vld [vmem:[%s2 + $0x18] sm:$0xff]
        %v450 = vld [vmem:[%s2 + $0x20] sm:$0xff]
        %v451 = vld [vmem:[%s2 + $0x28] sm:$0xff]
        %v452 = vld [vmem:[%s2 + $0x30] sm:$0xff]
        %v453 = vld [vmem:[%s2 + $0x38] sm:$0xff]
        %v454 = vld [vmem:[%s2 + $0x40] sm:$0xff]
        %v455 = vld [vmem:[%s2 + $0x48] sm:$0xff]
        %v456 = vld [vmem:[%s2 + $0x50] sm:$0xff]
        %v457 = vld [vmem:[%s2 + $0x58] sm:$0xff]
        %v458 = vld [vmem:[%s2 + $0x60] sm:$0xff]
        %v459 = vld [vmem:[%s2 + $0x68] sm:$0xff]
        %v460 = vld [vmem:[%s2 + $0x70] sm:$0xff]
        %v461 = vld [vmem:[%s2 + $0x78] sm:$0xff]
        %v462 = vld [vmem:[%s4] sm:$0xff]
        %v463 = vld [vmem:[%s4 + $0x8] sm:$0xff]
        %v464 = vld [vmem:[%s4 + $0x10] sm:$0xff]
        %v465 = vld [vmem:[%s4 + $0x18] sm:$0xff]
        %v466 = vld [vmem:[%s4 + $0x20] sm:$0xff]
        %v467 = vld [vmem:[%s4 + $0x28] sm:$0xff]
        %v468 = vld [vmem:[%s4 + $0x30] sm:$0xff]
        %v469 = vld [vmem:[%s4 + $0x38] sm:$0xff]
        %v470 = vld [vmem:[%s4 + $0x40] sm:$0xff]
        %v471 = vld [vmem:[%s4 + $0x48] sm:$0xff]
        %v472 = vld [vmem:[%s4 + $0x50] sm:$0xff]
        %v473 = vld [vmem:[%s4 + $0x58] sm:$0xff]
        %v474 = vld [vmem:[%s4 + $0x60] sm:$0xff]
        %v475 = vld [vmem:[%s4 + $0x68] sm:$0xff]
        %v476 = vld [vmem:[%s4 + $0x70] sm:$0xff]
        %v477 = vld [vmem:[%s4 + $0x78] sm:$0xff]
        %479 = vset.pattern.permute.xlu0 0
        %480 = vperm.xlu0 %479, %v462
        %v481 = vpop.permute.xlu0 %480
        %484 = vset.pattern.permute.xlu0 0
        %485 = vperm.xlu0 %484, %v463
        %v486 = vpop.permute.xlu0 %485
        %489 = vset.pattern.permute.xlu0 0
        %490 = vperm.xlu0 %489, %v464
        %v491 = vpop.permute.xlu0 %490
        %494 = vset.pattern.permute.xlu0 0
        %495 = vperm.xlu0 %494, %v465
        %v496 = vpop.permute.xlu0 %495
        %499 = vset.pattern.permute.xlu0 0
        %500 = vperm.xlu0 %499, %v466
        %v501 = vpop.permute.xlu0 %500
        %504 = vset.pattern.permute.xlu0 0
        %505 = vperm.xlu0 %504, %v467
        %v506 = vpop.permute.xlu0 %505
        %509 = vset.pattern.permute.xlu0 0
        %510 = vperm.xlu0 %509, %v468
        %v511 = vpop.permute.xlu0 %510
        %514 = vset.pattern.permute.xlu0 0
        %515 = vperm.xlu0 %514, %v469
        %v516 = vpop.permute.xlu0 %515
        %519 = vset.pattern.permute.xlu0 0
        %520 = vperm.xlu0 %519, %v470
        %v521 = vpop.permute.xlu0 %520
        %524 = vset.pattern.permute.xlu0 0
        %525 = vperm.xlu0 %524, %v471
        %v526 = vpop.permute.xlu0 %525
        %529 = vset.pattern.permute.xlu0 0
        %530 = vperm.xlu0 %529, %v472
        %v531 = vpop.permute.xlu0 %530
        %534 = vset.pattern.permute.xlu0 0
        %535 = vperm.xlu0 %534, %v473
        %v536 = vpop.permute.xlu0 %535
        %539 = vset.pattern.permute.xlu0 0
        %540 = vperm.xlu0 %539, %v474
        %v541 = vpop.permute.xlu0 %540
        %544 = vset.pattern.permute.xlu0 0
        %545 = vperm.xlu0 %544, %v475
        %v546 = vpop.permute.xlu0 %545
        %549 = vset.pattern.permute.xlu0 0
        %550 = vperm.xlu0 %549, %v476
        %v551 = vpop.permute.xlu0 %550
        %554 = vset.pattern.permute.xlu0 0
        %555 = vperm.xlu0 %554, %v477
        %v556 = vpop.permute.xlu0 %555
        %559 = vset.pattern.permute.xlu0 0
        %560 = vperm.xlu0 %559, %v446
        %v561 = vpop.permute.xlu0 %560
        %564 = vset.pattern.permute.xlu0 0
        %565 = vperm.xlu0 %564, %v447
        %v566 = vpop.permute.xlu0 %565
        %569 = vset.pattern.permute.xlu0 0
        %570 = vperm.xlu0 %569, %v448
        %v571 = vpop.permute.xlu0 %570
        %574 = vset.pattern.permute.xlu0 0
        %575 = vperm.xlu0 %574, %v449
        %v576 = vpop.permute.xlu0 %575
        %579 = vset.pattern.permute.xlu0 0
        %580 = vperm.xlu0 %579, %v450
        %v581 = vpop.permute.xlu0 %580
        %584 = vset.pattern.permute.xlu0 0
        %585 = vperm.xlu0 %584, %v451
        %v586 = vpop.permute.xlu0 %585
        %589 = vset.pattern.permute.xlu0 0
        %590 = vperm.xlu0 %589, %v452
        %v591 = vpop.permute.xlu0 %590
        %594 = vset.pattern.permute.xlu0 0
        %595 = vperm.xlu0 %594, %v453
        %v596 = vpop.permute.xlu0 %595
        %599 = vset.pattern.permute.xlu0 0
        %600 = vperm.xlu0 %599, %v454
        %v601 = vpop.permute.xlu0 %600
        %604 = vset.pattern.permute.xlu0 0
        %605 = vperm.xlu0 %604, %v455
        %v606 = vpop.permute.xlu0 %605
        %609 = vset.pattern.permute.xlu0 0
        %610 = vperm.xlu0 %609, %v456
        %v611 = vpop.permute.xlu0 %610
        %614 = vset.pattern.permute.xlu0 0
        %615 = vperm.xlu0 %614, %v457
        %v616 = vpop.permute.xlu0 %615
        %619 = vset.pattern.permute.xlu0 0
        %620 = vperm.xlu0 %619, %v458
        %v621 = vpop.permute.xlu0 %620
        %624 = vset.pattern.permute.xlu0 0
        %625 = vperm.xlu0 %624, %v459
        %v626 = vpop.permute.xlu0 %625
        %629 = vset.pattern.permute.xlu0 0
        %630 = vperm.xlu0 %629, %v460
        %v631 = vpop.permute.xlu0 %630
        %634 = vset.pattern.permute.xlu0 0
        %635 = vperm.xlu0 %634, %v461
        %v636 = vpop.permute.xlu0 %635
        %v638 = vmul.f32 %v368, %v561
        %v639 = vmul.f32 %v371, %v566
        %v640 = vmul.f32 %v376, %v571
        %v641 = vmul.f32 %v379, %v576
        %v642 = vmul.f32 %v384, %v581
        %v643 = vmul.f32 %v387, %v586
        %v644 = vmul.f32 %v392, %v591
        %v645 = vmul.f32 %v395, %v596
        %v646 = vmul.f32 %v400, %v601
        %v647 = vmul.f32 %v403, %v606
        %v648 = vmul.f32 %v408, %v611
        %v649 = vmul.f32 %v411, %v616
        %v650 = vmul.f32 %v416, %v621
        %v651 = vmul.f32 %v419, %v626
        %v652 = vmul.f32 %v424, %v631
        %v653 = vmul.f32 %v427, %v636
        %v654 = vpack.c.bf16 %v639, %v638
        %v655 = vpack.c.bf16 %v641, %v640
        %v656 = vpack.c.bf16 %v643, %v642
        %v657 = vpack.c.bf16 %v645, %v644
        %v658 = vpack.c.bf16 %v647, %v646
        %v659 = vpack.c.bf16 %v649, %v648
        %v660 = vpack.c.bf16 %v651, %v650
        %v661 = vpack.c.bf16 %v653, %v652
        %v662 = vtanh.bf16.pop %v654
        %v663 = vtanh.bf16.pop %v655
        %v664 = vtanh.bf16.pop %v656
        %v665 = vtanh.bf16.pop %v657
        %v666 = vtanh.bf16.pop %v658
        %v667 = vtanh.bf16.pop %v659
        %v668 = vtanh.bf16.pop %v660
        %v669 = vtanh.bf16.pop %v661
        %v686 = vunpack.c.l.b16 %v430
        %v687 = vunpack.c.l.b16 %v431
        %v688 = vunpack.c.l.b16 %v432
        %v689 = vunpack.c.l.b16 %v433
        %v690 = vunpack.c.l.b16 %v434
        %v691 = vunpack.c.l.b16 %v435
        %v692 = vunpack.c.l.b16 %v436
        %v693 = vunpack.c.l.b16 %v437
        %v694 = vunpack.c.l.b16 %v438
        %v695 = vunpack.c.l.b16 %v439
        %v696 = vunpack.c.l.b16 %v440
        %v697 = vunpack.c.l.b16 %v441
        %v698 = vunpack.c.l.b16 %v442
        %v699 = vunpack.c.l.b16 %v443
        %v700 = vunpack.c.l.b16 %v444
        %v701 = vunpack.c.l.b16 %v445
        %v702 = vpack.c.b16 %v687, %v686
        %v703 = vpack.c.b16 %v689, %v688
        %v704 = vpack.c.b16 %v691, %v690
        %v705 = vpack.c.b16 %v693, %v692
        %v706 = vpack.c.b16 %v695, %v694
        %v707 = vpack.c.b16 %v697, %v696
        %v708 = vpack.c.b16 %v699, %v698
        %v709 = vpack.c.b16 %v701, %v700
        %718 = vmatprep.subr.bf16.mxu0 0
        %719 = vmatpush1.bf16.msra.mxu0 %v669
        %720 = vmatprep.subr.bf16.mxu0 0
        %721 = vmatpush1.bf16.msra.mxu0 %v668
        %722 = vmatprep.subr.bf16.mxu0 0
        %723 = vmatpush1.bf16.msra.mxu0 %v667
        %724 = vmatprep.subr.bf16.mxu0 0
        %725 = vmatpush1.bf16.msra.mxu0 %v666
        %726 = vmatprep.subr.bf16.mxu0 0
        %727 = vmatpush1.bf16.msra.mxu0 %v665
        %728 = vmatprep.subr.bf16.mxu0 0
        %729 = vmatpush1.bf16.msra.mxu0 %v664
        %730 = vmatprep.subr.bf16.mxu0 0
        %731 = vmatpush1.bf16.msra.mxu0 %v663
        %732 = vmatprep.subr.bf16.mxu0 0
        %733 = vmatpush1.bf16.msra.mxu0 %v662
        %734 = vmatprep.subr.bf16.mxu0 0
        %735 = vmatpush2.bf16.msra.mxu0 0
        %736 = vmatprep.subr.bf16.mxu0 0
        %737 = vmatpush2.bf16.msra.mxu0 0
        %738 = vmatprep.subr.bf16.mxu0 0
        %739 = vmatpush2.bf16.msra.mxu0 0
        %740 = vmatprep.subr.bf16.mxu0 0
        %741 = vmatpush2.bf16.msra.mxu0 0
        %742 = vmatprep.subr.bf16.mxu0 0
        %743 = vmatpush2.bf16.msra.mxu0 0
        %744 = vmatprep.subr.bf16.mxu0 0
        %745 = vmatpush2.bf16.msra.mxu0 0
        %746 = vmatprep.subr.bf16.mxu0 0
        %747 = vmatpush2.bf16.msra.mxu0 0
        %748 = vmatprep.subr.bf16.mxu0 0
        %749 = vmatpush2.bf16.msra.mxu0 0
        %750 = vmatprep.mubr.bf16.mxu0 0
        %751 = vmatmul.mubr.bf16.gmra.mxu0 %v702
        %v752 = vpop.f32.mrf.mxu0
        %v753 = vadd.f32 %v481, %v752
        %v754 = vpop.f32.mrf.mxu0
        %v755 = vpop.f32.mrf.mxu0
        %v756 = vadd.f32 %v486, %v755
        %v757 = vpop.f32.mrf.mxu0
        %758 = vmatprep.mubr.bf16.mxu0 0
        %759 = vmatmul.mubr.bf16.gmra.mxu0 %v703
        %v760 = vpop.f32.mrf.mxu0
        %v761 = vadd.f32 %v491, %v760
        %v762 = vpop.f32.mrf.mxu0
        %v763 = vpop.f32.mrf.mxu0
        %v764 = vadd.f32 %v496, %v763
        %v765 = vpop.f32.mrf.mxu0
        %766 = vmatprep.mubr.bf16.mxu0 0
        %767 = vmatmul.mubr.bf16.gmra.mxu0 %v704
        %v768 = vpop.f32.mrf.mxu0
        %v769 = vadd.f32 %v501, %v768
        %v770 = vpop.f32.mrf.mxu0
        %v771 = vpop.f32.mrf.mxu0
        %v772 = vadd.f32 %v506, %v771
        %v773 = vpop.f32.mrf.mxu0
        %774 = vmatprep.mubr.bf16.mxu0 0
        %775 = vmatmul.mubr.bf16.gmra.mxu0 %v705
        %v776 = vpop.f32.mrf.mxu0
        %v777 = vadd.f32 %v511, %v776
        %v778 = vpop.f32.mrf.mxu0
        %v779 = vpop.f32.mrf.mxu0
        %v780 = vadd.f32 %v516, %v779
        %v781 = vpop.f32.mrf.mxu0
        %782 = vmatprep.mubr.bf16.mxu0 0
        %783 = vmatmul.mubr.bf16.gmra.mxu0 %v706
        %v784 = vpop.f32.mrf.mxu0
        %v785 = vadd.f32 %v521, %v784
        %v786 = vpop.f32.mrf.mxu0
        %v787 = vpop.f32.mrf.mxu0
        %v788 = vadd.f32 %v526, %v787
        %v789 = vpop.f32.mrf.mxu0
        %790 = vmatprep.mubr.bf16.mxu0 0
        %791 = vmatmul.mubr.bf16.gmra.mxu0 %v707
        %v792 = vpop.f32.mrf.mxu0
        %v793 = vadd.f32 %v531, %v792
        %v794 = vpop.f32.mrf.mxu0
        %v795 = vpop.f32.mrf.mxu0
        %v796 = vadd.f32 %v536, %v795
        %v797 = vpop.f32.mrf.mxu0
        %798 = vmatprep.mubr.bf16.mxu0 0
        %799 = vmatmul.mubr.bf16.gmra.mxu0 %v708
        %v800 = vpop.f32.mrf.mxu0
        %v801 = vadd.f32 %v541, %v800
        %v802 = vpop.f32.mrf.mxu0
        %v803 = vpop.f32.mrf.mxu0
        %v804 = vadd.f32 %v546, %v803
        %v805 = vpop.f32.mrf.mxu0
        %806 = vmatprep.mubr.bf16.mxu0 0
        %807 = vmatmul.mubr.bf16.gmra.mxu0 %v709
        %v808 = vpop.f32.mrf.mxu0
        %v809 = vadd.f32 %v551, %v808
        %v810 = vpop.f32.mrf.mxu0
        %v811 = vpop.f32.mrf.mxu0
        %v812 = vadd.f32 %v556, %v811
        %v813 = vpop.f32.mrf.mxu0
        %814 = vdwg.mxu0
        %815 = vst [vmem:[%s237] sm:$0xff] %v753
        %816 = vst [vmem:[%s237 + $0x8] sm:$0xff] %v756
        %817 = vst [vmem:[%s237 + $0x10] sm:$0xff] %v761
        %818 = vst [vmem:[%s237 + $0x18] sm:$0xff] %v764
        %819 = vst [vmem:[%s237 + $0x20] sm:$0xff] %v769
        %820 = vst [vmem:[%s237 + $0x28] sm:$0xff] %v772
        %821 = vst [vmem:[%s237 + $0x30] sm:$0xff] %v777
        %822 = vst [vmem:[%s237 + $0x38] sm:$0xff] %v780
        %823 = vst [vmem:[%s237 + $0x40] sm:$0xff] %v785
        %824 = vst [vmem:[%s237 + $0x48] sm:$0xff] %v788
        %825 = vst [vmem:[%s237 + $0x50] sm:$0xff] %v793
        %826 = vst [vmem:[%s237 + $0x58] sm:$0xff] %v796
        %827 = vst [vmem:[%s237 + $0x60] sm:$0xff] %v801
        %828 = vst [vmem:[%s237 + $0x68] sm:$0xff] %v804
        %829 = vst [vmem:[%s237 + $0x70] sm:$0xff] %v809
        %830 = vst [vmem:[%s237 + $0x78] sm:$0xff] %v812
        %831 = vset.pattern.permute.xlu0 1
        %832 = vperm.xlu0 %831, %v446
        %v833 = vpop.permute.xlu0 %832
        %835 = vset.pattern.permute.xlu0 1
        %836 = vperm.xlu0 %835, %v447
        %v837 = vpop.permute.xlu0 %836
        %839 = vset.pattern.permute.xlu0 1
        %840 = vperm.xlu0 %839, %v448
        %v841 = vpop.permute.xlu0 %840
        %843 = vset.pattern.permute.xlu0 1
        %844 = vperm.xlu0 %843, %v449
        %v845 = vpop.permute.xlu0 %844
        %847 = vset.pattern.permute.xlu0 1
        %848 = vperm.xlu0 %847, %v450
        %v849 = vpop.permute.xlu0 %848
        %851 = vset.pattern.permute.xlu0 1
        %852 = vperm.xlu0 %851, %v451
        %v853 = vpop.permute.xlu0 %852
        %855 = vset.pattern.permute.xlu0 1
        %856 = vperm.xlu0 %855, %v452
        %v857 = vpop.permute.xlu0 %856
        %859 = vset.pattern.permute.xlu0 1
        %860 = vperm.xlu0 %859, %v453
        %v861 = vpop.permute.xlu0 %860
        %863 = vset.pattern.permute.xlu0 1
        %864 = vperm.xlu0 %863, %v454
        %v865 = vpop.permute.xlu0 %864
        %867 = vset.pattern.permute.xlu0 1
        %868 = vperm.xlu0 %867, %v455
        %v869 = vpop.permute.xlu0 %868
        %871 = vset.pattern.permute.xlu0 1
        %872 = vperm.xlu0 %871, %v456
        %v873 = vpop.permute.xlu0 %872
        %875 = vset.pattern.permute.xlu0 1
        %876 = vperm.xlu0 %875, %v457
        %v877 = vpop.permute.xlu0 %876
        %879 = vset.pattern.permute.xlu0 1
        %880 = vperm.xlu0 %879, %v458
        %v881 = vpop.permute.xlu0 %880
        %883 = vset.pattern.permute.xlu0 1
        %884 = vperm.xlu0 %883, %v459
        %v885 = vpop.permute.xlu0 %884
        %887 = vset.pattern.permute.xlu0 1
        %888 = vperm.xlu0 %887, %v460
        %v889 = vpop.permute.xlu0 %888
        %891 = vset.pattern.permute.xlu0 1
        %892 = vperm.xlu0 %891, %v461
        %v893 = vpop.permute.xlu0 %892
        %v895 = vmul.f32 %v368, %v833
        %v896 = vmul.f32 %v371, %v837
        %v897 = vmul.f32 %v376, %v841
        %v898 = vmul.f32 %v379, %v845
        %v899 = vmul.f32 %v384, %v849
        %v900 = vmul.f32 %v387, %v853
        %v901 = vmul.f32 %v392, %v857
        %v902 = vmul.f32 %v395, %v861
        %v903 = vmul.f32 %v400, %v865
        %v904 = vmul.f32 %v403, %v869
        %v905 = vmul.f32 %v408, %v873
        %v906 = vmul.f32 %v411, %v877
        %v907 = vmul.f32 %v416, %v881
        %v908 = vmul.f32 %v419, %v885
        %v909 = vmul.f32 %v424, %v889
        %v910 = vmul.f32 %v427, %v893
        %v911 = vpack.c.bf16 %v896, %v895
        %v912 = vpack.c.bf16 %v898, %v897
        %v913 = vpack.c.bf16 %v900, %v899
        %v914 = vpack.c.bf16 %v902, %v901
        %v915 = vpack.c.bf16 %v904, %v903
        %v916 = vpack.c.bf16 %v906, %v905
        %v917 = vpack.c.bf16 %v908, %v907
        %v918 = vpack.c.bf16 %v910, %v909
        %v919 = vtanh.bf16.pop %v911
        %v920 = vtanh.bf16.pop %v912
        %v921 = vtanh.bf16.pop %v913
        %v922 = vtanh.bf16.pop %v914
        %v923 = vtanh.bf16.pop %v915
        %v924 = vtanh.bf16.pop %v916
        %v925 = vtanh.bf16.pop %v917
        %v926 = vtanh.bf16.pop %v918
        %927 = vmatprep.subr.bf16.mxu0 0
        %928 = vmatpush1.bf16.msra.mxu0 %v926
        %929 = vmatprep.subr.bf16.mxu0 0
        %930 = vmatpush1.bf16.msra.mxu0 %v925
        %931 = vmatprep.subr.bf16.mxu0 0
        %932 = vmatpush1.bf16.msra.mxu0 %v924
        %933 = vmatprep.subr.bf16.mxu0 0
        %934 = vmatpush1.bf16.msra.mxu0 %v923
        %935 = vmatprep.subr.bf16.mxu0 0
        %936 = vmatpush1.bf16.msra.mxu0 %v922
        %937 = vmatprep.subr.bf16.mxu0 0
        %938 = vmatpush1.bf16.msra.mxu0 %v921
        %939 = vmatprep.subr.bf16.mxu0 0
        %940 = vmatpush1.bf16.msra.mxu0 %v920
        %941 = vmatprep.subr.bf16.mxu0 0
        %942 = vmatpush1.bf16.msra.mxu0 %v919
        %943 = vmatprep.subr.bf16.mxu0 0
        %944 = vmatpush2.bf16.msra.mxu0 0
        %945 = vmatprep.subr.bf16.mxu0 0
        %946 = vmatpush2.bf16.msra.mxu0 0
        %947 = vmatprep.subr.bf16.mxu0 0
        %948 = vmatpush2.bf16.msra.mxu0 0
        %949 = vmatprep.subr.bf16.mxu0 0
        %950 = vmatpush2.bf16.msra.mxu0 0
        %951 = vmatprep.subr.bf16.mxu0 0
        %952 = vmatpush2.bf16.msra.mxu0 0
        %953 = vmatprep.subr.bf16.mxu0 0
        %954 = vmatpush2.bf16.msra.mxu0 0
        %955 = vmatprep.subr.bf16.mxu0 0
        %956 = vmatpush2.bf16.msra.mxu0 0
        %957 = vmatprep.subr.bf16.mxu0 0
        %958 = vmatpush2.bf16.msra.mxu0 0
        %959 = vmatprep.mubr.bf16.mxu0 0
        %960 = vmatmul.mubr.bf16.gmra.mxu0 %v702
        %v961 = vpop.f32.mrf.mxu0
        %v962 = vadd.f32 %v481, %v961
        %v963 = vpop.f32.mrf.mxu0
        %v964 = vpop.f32.mrf.mxu0
        %v965 = vadd.f32 %v486, %v964
        %v966 = vpop.f32.mrf.mxu0
        %967 = vmatprep.mubr.bf16.mxu0 0
        %968 = vmatmul.mubr.bf16.gmra.mxu0 %v703
        %v969 = vpop.f32.mrf.mxu0
        %v970 = vadd.f32 %v491, %v969
        %v971 = vpop.f32.mrf.mxu0
        %v972 = vpop.f32.mrf.mxu0
        %v973 = vadd.f32 %v496, %v972
        %v974 = vpop.f32.mrf.mxu0
        %975 = vmatprep.mubr.bf16.mxu0 0
        %976 = vmatmul.mubr.bf16.gmra.mxu0 %v704
        %v977 = vpop.f32.mrf.mxu0
        %v978 = vadd.f32 %v501, %v977
        %v979 = vpop.f32.mrf.mxu0
        %v980 = vpop.f32.mrf.mxu0
        %v981 = vadd.f32 %v506, %v980
        %v982 = vpop.f32.mrf.mxu0
        %983 = vmatprep.mubr.bf16.mxu0 0
        %984 = vmatmul.mubr.bf16.gmra.mxu0 %v705
        %v985 = vpop.f32.mrf.mxu0
        %v986 = vadd.f32 %v511, %v985
        %v987 = vpop.f32.mrf.mxu0
        %v988 = vpop.f32.mrf.mxu0
        %v989 = vadd.f32 %v516, %v988
        %v990 = vpop.f32.mrf.mxu0
        %991 = vmatprep.mubr.bf16.mxu0 0
        %992 = vmatmul.mubr.bf16.gmra.mxu0 %v706
        %v993 = vpop.f32.mrf.mxu0
        %v994 = vadd.f32 %v521, %v993
        %v995 = vpop.f32.mrf.mxu0
        %v996 = vpop.f32.mrf.mxu0
        %v997 = vadd.f32 %v526, %v996
        %v998 = vpop.f32.mrf.mxu0
        %999 = vmatprep.mubr.bf16.mxu0 0
        %1000 = vmatmul.mubr.bf16.gmra.mxu0 %v707
        %v1001 = vpop.f32.mrf.mxu0
        %v1002 = vadd.f32 %v531, %v1001
        %v1003 = vpop.f32.mrf.mxu0
        %v1004 = vpop.f32.mrf.mxu0
        %v1005 = vadd.f32 %v536, %v1004
        %v1006 = vpop.f32.mrf.mxu0
        %1007 = vmatprep.mubr.bf16.mxu0 0
        %1008 = vmatmul.mubr.bf16.gmra.mxu0 %v708
        %v1009 = vpop.f32.mrf.mxu0
        %v1010 = vadd.f32 %v541, %v1009
        %v1011 = vpop.f32.mrf.mxu0
        %v1012 = vpop.f32.mrf.mxu0
        %v1013 = vadd.f32 %v546, %v1012
        %v1014 = vpop.f32.mrf.mxu0
        %1015 = vmatprep.mubr.bf16.mxu0 0
        %1016 = vmatmul.mubr.bf16.gmra.mxu0 %v709
        %v1017 = vpop.f32.mrf.mxu0
        %v1018 = vadd.f32 %v551, %v1017
        %v1019 = vpop.f32.mrf.mxu0
        %v1020 = vpop.f32.mrf.mxu0
        %v1021 = vadd.f32 %v556, %v1020
        %v1022 = vpop.f32.mrf.mxu0
        %1023 = vdwg.mxu0
        %s1024 = scalar_lea.vmem %s237, 128 [#allocation2]
        %1025 = vst [vmem:[%s1024] sm:$0xff] %v962
        %1026 = vst [vmem:[%s1024 + $0x8] sm:$0xff] %v965
        %1027 = vst [vmem:[%s1024 + $0x10] sm:$0xff] %v970
        %1028 = vst [vmem:[%s1024 + $0x18] sm:$0xff] %v973
        %1029 = vst [vmem:[%s1024 + $0x20] sm:$0xff] %v978
        %1030 = vst [vmem:[%s1024 + $0x28] sm:$0xff] %v981
        %1031 = vst [vmem:[%s1024 + $0x30] sm:$0xff] %v986
        %1032 = vst [vmem:[%s1024 + $0x38] sm:$0xff] %v989
        %1033 = vst [vmem:[%s1024 + $0x40] sm:$0xff] %v994
        %1034 = vst [vmem:[%s1024 + $0x48] sm:$0xff] %v997
        %1035 = vst [vmem:[%s1024 + $0x50] sm:$0xff] %v1002
        %1036 = vst [vmem:[%s1024 + $0x58] sm:$0xff] %v1005
        %1037 = vst [vmem:[%s1024 + $0x60] sm:$0xff] %v1010
        %1038 = vst [vmem:[%s1024 + $0x68] sm:$0xff] %v1013
        %1039 = vst [vmem:[%s1024 + $0x70] sm:$0xff] %v1018
        %1040 = vst [vmem:[%s1024 + $0x78] sm:$0xff] %v1021
        %1041 = vset.pattern.permute.xlu0 2
        %1042 = vperm.xlu0 %1041, %v446
        %v1043 = vpop.permute.xlu0 %1042
        %1045 = vset.pattern.permute.xlu0 2
        %1046 = vperm.xlu0 %1045, %v447
        %v1047 = vpop.permute.xlu0 %1046
        %1049 = vset.pattern.permute.xlu0 2
        %1050 = vperm.xlu0 %1049, %v448
        %v1051 = vpop.permute.xlu0 %1050
        %1053 = vset.pattern.permute.xlu0 2
        %1054 = vperm.xlu0 %1053, %v449
        %v1055 = vpop.permute.xlu0 %1054
        %1057 = vset.pattern.permute.xlu0 2
        %1058 = vperm.xlu0 %1057, %v450
        %v1059 = vpop.permute.xlu0 %1058
        %1061 = vset.pattern.permute.xlu0 2
        %1062 = vperm.xlu0 %1061, %v451
        %v1063 = vpop.permute.xlu0 %1062
        %1065 = vset.pattern.permute.xlu0 2
        %1066 = vperm.xlu0 %1065, %v452
        %v1067 = vpop.permute.xlu0 %1066
        %1069 = vset.pattern.permute.xlu0 2
        %1070 = vperm.xlu0 %1069, %v453
        %v1071 = vpop.permute.xlu0 %1070
        %1073 = vset.pattern.permute.xlu0 2
        %1074 = vperm.xlu0 %1073, %v454
        %v1075 = vpop.permute.xlu0 %1074
        %1077 = vset.pattern.permute.xlu0 2
        %1078 = vperm.xlu0 %1077, %v455
        %v1079 = vpop.permute.xlu0 %1078
        %1081 = vset.pattern.permute.xlu0 2
        %1082 = vperm.xlu0 %1081, %v456
        %v1083 = vpop.permute.xlu0 %1082
        %1085 = vset.pattern.permute.xlu0 2
        %1086 = vperm.xlu0 %1085, %v457
        %v1087 = vpop.permute.xlu0 %1086
        %1089 = vset.pattern.permute.xlu0 2
        %1090 = vperm.xlu0 %1089, %v458
        %v1091 = vpop.permute.xlu0 %1090
        %1093 = vset.pattern.permute.xlu0 2
        %1094 = vperm.xlu0 %1093, %v459
        %v1095 = vpop.permute.xlu0 %1094
        %1097 = vset.pattern.permute.xlu0 2
        %1098 = vperm.xlu0 %1097, %v460
        %v1099 = vpop.permute.xlu0 %1098
        %1101 = vset.pattern.permute.xlu0 2
        %1102 = vperm.xlu0 %1101, %v461
        %v1103 = vpop.permute.xlu0 %1102
        %v1105 = vmul.f32 %v368, %v1043
        %v1106 = vmul.f32 %v371, %v1047
        %v1107 = vmul.f32 %v376, %v1051
        %v1108 = vmul.f32 %v379, %v1055
        %v1109 = vmul.f32 %v384, %v1059
        %v1110 = vmul.f32 %v387, %v1063
        %v1111 = vmul.f32 %v392, %v1067
        %v1112 = vmul.f32 %v395, %v1071
        %v1113 = vmul.f32 %v400, %v1075
        %v1114 = vmul.f32 %v403, %v1079
        %v1115 = vmul.f32 %v408, %v1083
        %v1116 = vmul.f32 %v411, %v1087
        %v1117 = vmul.f32 %v416, %v1091
        %v1118 = vmul.f32 %v419, %v1095
        %v1119 = vmul.f32 %v424, %v1099
        %v1120 = vmul.f32 %v427, %v1103
        %v1121 = vpack.c.bf16 %v1106, %v1105
        %v1122 = vpack.c.bf16 %v1108, %v1107
        %v1123 = vpack.c.bf16 %v1110, %v1109
        %v1124 = vpack.c.bf16 %v1112, %v1111
        %v1125 = vpack.c.bf16 %v1114, %v1113
        %v1126 = vpack.c.bf16 %v1116, %v1115
        %v1127 = vpack.c.bf16 %v1118, %v1117
        %v1128 = vpack.c.bf16 %v1120, %v1119
        %v1129 = vtanh.bf16.pop %v1121
        %v1130 = vtanh.bf16.pop %v1122
        %v1131 = vtanh.bf16.pop %v1123
        %v1132 = vtanh.bf16.pop %v1124
        %v1133 = vtanh.bf16.pop %v1125
        %v1134 = vtanh.bf16.pop %v1126
        %v1135 = vtanh.bf16.pop %v1127
        %v1136 = vtanh.bf16.pop %v1128
        %1137 = vmatprep.subr.bf16.mxu0 0
        %1138 = vmatpush1.bf16.msra.mxu0 %v1136
        %1139 = vmatprep.subr.bf16.mxu0 0
        %1140 = vmatpush1.bf16.msra.mxu0 %v1135
        %1141 = vmatprep.subr.bf16.mxu0 0
        %1142 = vmatpush1.bf16.msra.mxu0 %v1134
        %1143 = vmatprep.subr.bf16.mxu0 0
        %1144 = vmatpush1.bf16.msra.mxu0 %v1133
        %1145 = vmatprep.subr.bf16.mxu0 0
        %1146 = vmatpush1.bf16.msra.mxu0 %v1132
        %1147 = vmatprep.subr.bf16.mxu0 0
        %1148 = vmatpush1.bf16.msra.mxu0 %v1131
        %1149 = vmatprep.subr.bf16.mxu0 0
        %1150 = vmatpush1.bf16.msra.mxu0 %v1130
        %1151 = vmatprep.subr.bf16.mxu0 0
        %1152 = vmatpush1.bf16.msra.mxu0 %v1129
        %1153 = vmatprep.subr.bf16.mxu0 0
        %1154 = vmatpush2.bf16.msra.mxu0 0
        %1155 = vmatprep.subr.bf16.mxu0 0
        %1156 = vmatpush2.bf16.msra.mxu0 0
        %1157 = vmatprep.subr.bf16.mxu0 0
        %1158 = vmatpush2.bf16.msra.mxu0 0
        %1159 = vmatprep.subr.bf16.mxu0 0
        %1160 = vmatpush2.bf16.msra.mxu0 0
        %1161 = vmatprep.subr.bf16.mxu0 0
        %1162 = vmatpush2.bf16.msra.mxu0 0
        %1163 = vmatprep.subr.bf16.mxu0 0
        %1164 = vmatpush2.bf16.msra.mxu0 0
        %1165 = vmatprep.subr.bf16.mxu0 0
        %1166 = vmatpush2.bf16.msra.mxu0 0
        %1167 = vmatprep.subr.bf16.mxu0 0
        %1168 = vmatpush2.bf16.msra.mxu0 0
        %1169 = vmatprep.mubr.bf16.mxu0 0
        %1170 = vmatmul.mubr.bf16.gmra.mxu0 %v702
        %v1171 = vpop.f32.mrf.mxu0
        %v1172 = vadd.f32 %v481, %v1171
        %v1173 = vpop.f32.mrf.mxu0
        %v1174 = vpop.f32.mrf.mxu0
        %v1175 = vadd.f32 %v486, %v1174
        %v1176 = vpop.f32.mrf.mxu0
        %1177 = vmatprep.mubr.bf16.mxu0 0
        %1178 = vmatmul.mubr.bf16.gmra.mxu0 %v703
        %v1179 = vpop.f32.mrf.mxu0
        %v1180 = vadd.f32 %v491, %v1179
        %v1181 = vpop.f32.mrf.mxu0
        %v1182 = vpop.f32.mrf.mxu0
        %v1183 = vadd.f32 %v496, %v1182
        %v1184 = vpop.f32.mrf.mxu0
        %1185 = vmatprep.mubr.bf16.mxu0 0
        %1186 = vmatmul.mubr.bf16.gmra.mxu0 %v704
        %v1187 = vpop.f32.mrf.mxu0
        %v1188 = vadd.f32 %v501, %v1187
        %v1189 = vpop.f32.mrf.mxu0
        %v1190 = vpop.f32.mrf.mxu0
        %v1191 = vadd.f32 %v506, %v1190
        %v1192 = vpop.f32.mrf.mxu0
        %1193 = vmatprep.mubr.bf16.mxu0 0
        %1194 = vmatmul.mubr.bf16.gmra.mxu0 %v705
        %v1195 = vpop.f32.mrf.mxu0
        %v1196 = vadd.f32 %v511, %v1195
        %v1197 = vpop.f32.mrf.mxu0
        %v1198 = vpop.f32.mrf.mxu0
        %v1199 = vadd.f32 %v516, %v1198
        %v1200 = vpop.f32.mrf.mxu0
        %1201 = vmatprep.mubr.bf16.mxu0 0
        %1202 = vmatmul.mubr.bf16.gmra.mxu0 %v706
        %v1203 = vpop.f32.mrf.mxu0
        %v1204 = vadd.f32 %v521, %v1203
        %v1205 = vpop.f32.mrf.mxu0
        %v1206 = vpop.f32.mrf.mxu0
        %v1207 = vadd.f32 %v526, %v1206
        %v1208 = vpop.f32.mrf.mxu0
        %1209 = vmatprep.mubr.bf16.mxu0 0
        %1210 = vmatmul.mubr.bf16.gmra.mxu0 %v707
        %v1211 = vpop.f32.mrf.mxu0
        %v1212 = vadd.f32 %v531, %v1211
        %v1213 = vpop.f32.mrf.mxu0
        %v1214 = vpop.f32.mrf.mxu0
        %v1215 = vadd.f32 %v536, %v1214
        %v1216 = vpop.f32.mrf.mxu0
        %1217 = vmatprep.mubr.bf16.mxu0 0
        %1218 = vmatmul.mubr.bf16.gmra.mxu0 %v708
        %v1219 = vpop.f32.mrf.mxu0
        %v1220 = vadd.f32 %v541, %v1219
        %v1221 = vpop.f32.mrf.mxu0
        %v1222 = vpop.f32.mrf.mxu0
        %v1223 = vadd.f32 %v546, %v1222
        %v1224 = vpop.f32.mrf.mxu0
        %1225 = vmatprep.mubr.bf16.mxu0 0
        %1226 = vmatmul.mubr.bf16.gmra.mxu0 %v709
        %v1227 = vpop.f32.mrf.mxu0
        %v1228 = vadd.f32 %v551, %v1227
        %v1229 = vpop.f32.mrf.mxu0
        %v1230 = vpop.f32.mrf.mxu0
        %v1231 = vadd.f32 %v556, %v1230
        %v1232 = vpop.f32.mrf.mxu0
        %1233 = vdwg.mxu0
        %s1234 = scalar_lea.vmem %s237, 256 [#allocation2]
        %1235 = vst [vmem:[%s1234] sm:$0xff] %v1172
        %1236 = vst [vmem:[%s1234 + $0x8] sm:$0xff] %v1175
        %1237 = vst [vmem:[%s1234 + $0x10] sm:$0xff] %v1180
        %1238 = vst [vmem:[%s1234 + $0x18] sm:$0xff] %v1183
        %1239 = vst [vmem:[%s1234 + $0x20] sm:$0xff] %v1188
        %1240 = vst [vmem:[%s1234 + $0x28] sm:$0xff] %v1191
        %1241 = vst [vmem:[%s1234 + $0x30] sm:$0xff] %v1196
        %1242 = vst [vmem:[%s1234 + $0x38] sm:$0xff] %v1199
        %1243 = vst [vmem:[%s1234 + $0x40] sm:$0xff] %v1204
        %1244 = vst [vmem:[%s1234 + $0x48] sm:$0xff] %v1207
        %1245 = vst [vmem:[%s1234 + $0x50] sm:$0xff] %v1212
        %1246 = vst [vmem:[%s1234 + $0x58] sm:$0xff] %v1215
        %1247 = vst [vmem:[%s1234 + $0x60] sm:$0xff] %v1220
        %1248 = vst [vmem:[%s1234 + $0x68] sm:$0xff] %v1223
        %1249 = vst [vmem:[%s1234 + $0x70] sm:$0xff] %v1228
        %1250 = vst [vmem:[%s1234 + $0x78] sm:$0xff] %v1231
        %1251 = vset.pattern.permute.xlu0 3
        %1252 = vperm.xlu0 %1251, %v446
        %v1253 = vpop.permute.xlu0 %1252
        %1255 = vset.pattern.permute.xlu0 3
        %1256 = vperm.xlu0 %1255, %v447
        %v1257 = vpop.permute.xlu0 %1256
        %1259 = vset.pattern.permute.xlu0 3
        %1260 = vperm.xlu0 %1259, %v448
        %v1261 = vpop.permute.xlu0 %1260
        %1263 = vset.pattern.permute.xlu0 3
        %1264 = vperm.xlu0 %1263, %v449
        %v1265 = vpop.permute.xlu0 %1264
        %1267 = vset.pattern.permute.xlu0 3
        %1268 = vperm.xlu0 %1267, %v450
        %v1269 = vpop.permute.xlu0 %1268
        %1271 = vset.pattern.permute.xlu0 3
        %1272 = vperm.xlu0 %1271, %v451
        %v1273 = vpop.permute.xlu0 %1272
        %1275 = vset.pattern.permute.xlu0 3
        %1276 = vperm.xlu0 %1275, %v452
        %v1277 = vpop.permute.xlu0 %1276
        %1279 = vset.pattern.permute.xlu0 3
        %1280 = vperm.xlu0 %1279, %v453
        %v1281 = vpop.permute.xlu0 %1280
        %1283 = vset.pattern.permute.xlu0 3
        %1284 = vperm.xlu0 %1283, %v454
        %v1285 = vpop.permute.xlu0 %1284
        %1287 = vset.pattern.permute.xlu0 3
        %1288 = vperm.xlu0 %1287, %v455
        %v1289 = vpop.permute.xlu0 %1288
        %1291 = vset.pattern.permute.xlu0 3
        %1292 = vperm.xlu0 %1291, %v456
        %v1293 = vpop.permute.xlu0 %1292
        %1295 = vset.pattern.permute.xlu0 3
        %1296 = vperm.xlu0 %1295, %v457
        %v1297 = vpop.permute.xlu0 %1296
        %1299 = vset.pattern.permute.xlu0 3
        %1300 = vperm.xlu0 %1299, %v458
        %v1301 = vpop.permute.xlu0 %1300
        %1303 = vset.pattern.permute.xlu0 3
        %1304 = vperm.xlu0 %1303, %v459
        %v1305 = vpop.permute.xlu0 %1304
        %1307 = vset.pattern.permute.xlu0 3
        %1308 = vperm.xlu0 %1307, %v460
        %v1309 = vpop.permute.xlu0 %1308
        %1311 = vset.pattern.permute.xlu0 3
        %1312 = vperm.xlu0 %1311, %v461
        %v1313 = vpop.permute.xlu0 %1312
        %v1315 = vmul.f32 %v368, %v1253
        %v1316 = vmul.f32 %v371, %v1257
        %v1317 = vmul.f32 %v376, %v1261
        %v1318 = vmul.f32 %v379, %v1265
        %v1319 = vmul.f32 %v384, %v1269
        %v1320 = vmul.f32 %v387, %v1273
        %v1321 = vmul.f32 %v392, %v1277
        %v1322 = vmul.f32 %v395, %v1281
        %v1323 = vmul.f32 %v400, %v1285
        %v1324 = vmul.f32 %v403, %v1289
        %v1325 = vmul.f32 %v408, %v1293
        %v1326 = vmul.f32 %v411, %v1297
        %v1327 = vmul.f32 %v416, %v1301
        %v1328 = vmul.f32 %v419, %v1305
        %v1329 = vmul.f32 %v424, %v1309
        %v1330 = vmul.f32 %v427, %v1313
        %v1331 = vpack.c.bf16 %v1316, %v1315
        %v1332 = vpack.c.bf16 %v1318, %v1317
        %v1333 = vpack.c.bf16 %v1320, %v1319
        %v1334 = vpack.c.bf16 %v1322, %v1321
        %v1335 = vpack.c.bf16 %v1324, %v1323
        %v1336 = vpack.c.bf16 %v1326, %v1325
        %v1337 = vpack.c.bf16 %v1328, %v1327
        %v1338 = vpack.c.bf16 %v1330, %v1329
        %v1339 = vtanh.bf16.pop %v1331
        %v1340 = vtanh.bf16.pop %v1332
        %v1341 = vtanh.bf16.pop %v1333
        %v1342 = vtanh.bf16.pop %v1334
        %v1343 = vtanh.bf16.pop %v1335
        %v1344 = vtanh.bf16.pop %v1336
        %v1345 = vtanh.bf16.pop %v1337
        %v1346 = vtanh.bf16.pop %v1338
        %1347 = vmatprep.subr.bf16.mxu0 0
        %1348 = vmatpush1.bf16.msra.mxu0 %v1346
        %1349 = vmatprep.subr.bf16.mxu0 0
        %1350 = vmatpush1.bf16.msra.mxu0 %v1345
        %1351 = vmatprep.subr.bf16.mxu0 0
        %1352 = vmatpush1.bf16.msra.mxu0 %v1344
        %1353 = vmatprep.subr.bf16.mxu0 0
        %1354 = vmatpush1.bf16.msra.mxu0 %v1343
        %1355 = vmatprep.subr.bf16.mxu0 0
        %1356 = vmatpush1.bf16.msra.mxu0 %v1342
        %1357 = vmatprep.subr.bf16.mxu0 0
        %1358 = vmatpush1.bf16.msra.mxu0 %v1341
        %1359 = vmatprep.subr.bf16.mxu0 0
        %1360 = vmatpush1.bf16.msra.mxu0 %v1340
        %1361 = vmatprep.subr.bf16.mxu0 0
        %1362 = vmatpush1.bf16.msra.mxu0 %v1339
        %1363 = vmatprep.subr.bf16.mxu0 0
        %1364 = vmatpush2.bf16.msra.mxu0 0
        %1365 = vmatprep.subr.bf16.mxu0 0
        %1366 = vmatpush2.bf16.msra.mxu0 0
        %1367 = vmatprep.subr.bf16.mxu0 0
        %1368 = vmatpush2.bf16.msra.mxu0 0
        %1369 = vmatprep.subr.bf16.mxu0 0
        %1370 = vmatpush2.bf16.msra.mxu0 0
        %1371 = vmatprep.subr.bf16.mxu0 0
        %1372 = vmatpush2.bf16.msra.mxu0 0
        %1373 = vmatprep.subr.bf16.mxu0 0
        %1374 = vmatpush2.bf16.msra.mxu0 0
        %1375 = vmatprep.subr.bf16.mxu0 0
        %1376 = vmatpush2.bf16.msra.mxu0 0
        %1377 = vmatprep.subr.bf16.mxu0 0
        %1378 = vmatpush2.bf16.msra.mxu0 0
        %1379 = vmatprep.mubr.bf16.mxu0 0
        %1380 = vmatmul.mubr.bf16.gmra.mxu0 %v702
        %v1381 = vpop.f32.mrf.mxu0
        %v1382 = vadd.f32 %v481, %v1381
        %v1383 = vpop.f32.mrf.mxu0
        %v1384 = vpop.f32.mrf.mxu0
        %v1385 = vadd.f32 %v486, %v1384
        %v1386 = vpop.f32.mrf.mxu0
        %1387 = vmatprep.mubr.bf16.mxu0 0
        %1388 = vmatmul.mubr.bf16.gmra.mxu0 %v703
        %v1389 = vpop.f32.mrf.mxu0
        %v1390 = vadd.f32 %v491, %v1389
        %v1391 = vpop.f32.mrf.mxu0
        %v1392 = vpop.f32.mrf.mxu0
        %v1393 = vadd.f32 %v496, %v1392
        %v1394 = vpop.f32.mrf.mxu0
        %1395 = vmatprep.mubr.bf16.mxu0 0
        %1396 = vmatmul.mubr.bf16.gmra.mxu0 %v704
        %v1397 = vpop.f32.mrf.mxu0
        %v1398 = vadd.f32 %v501, %v1397
        %v1399 = vpop.f32.mrf.mxu0
        %v1400 = vpop.f32.mrf.mxu0
        %v1401 = vadd.f32 %v506, %v1400
        %v1402 = vpop.f32.mrf.mxu0
        %1403 = vmatprep.mubr.bf16.mxu0 0
        %1404 = vmatmul.mubr.bf16.gmra.mxu0 %v705
        %v1405 = vpop.f32.mrf.mxu0
        %v1406 = vadd.f32 %v511, %v1405
        %v1407 = vpop.f32.mrf.mxu0
        %v1408 = vpop.f32.mrf.mxu0
        %v1409 = vadd.f32 %v516, %v1408
        %v1410 = vpop.f32.mrf.mxu0
        %1411 = vmatprep.mubr.bf16.mxu0 0
        %1412 = vmatmul.mubr.bf16.gmra.mxu0 %v706
        %v1413 = vpop.f32.mrf.mxu0
        %v1414 = vadd.f32 %v521, %v1413
        %v1415 = vpop.f32.mrf.mxu0
        %v1416 = vpop.f32.mrf.mxu0
        %v1417 = vadd.f32 %v526, %v1416
        %v1418 = vpop.f32.mrf.mxu0
        %1419 = vmatprep.mubr.bf16.mxu0 0
        %1420 = vmatmul.mubr.bf16.gmra.mxu0 %v707
        %v1421 = vpop.f32.mrf.mxu0
        %v1422 = vadd.f32 %v531, %v1421
        %v1423 = vpop.f32.mrf.mxu0
        %v1424 = vpop.f32.mrf.mxu0
        %v1425 = vadd.f32 %v536, %v1424
        %v1426 = vpop.f32.mrf.mxu0
        %1427 = vmatprep.mubr.bf16.mxu0 0
        %1428 = vmatmul.mubr.bf16.gmra.mxu0 %v708
        %v1429 = vpop.f32.mrf.mxu0
        %v1430 = vadd.f32 %v541, %v1429
        %v1431 = vpop.f32.mrf.mxu0
        %v1432 = vpop.f32.mrf.mxu0
        %v1433 = vadd.f32 %v546, %v1432
        %v1434 = vpop.f32.mrf.mxu0
        %1435 = vmatprep.mubr.bf16.mxu0 0
        %1436 = vmatmul.mubr.bf16.gmra.mxu0 %v709
        %v1437 = vpop.f32.mrf.mxu0
        %v1438 = vadd.f32 %v551, %v1437
        %v1439 = vpop.f32.mrf.mxu0
        %v1440 = vpop.f32.mrf.mxu0
        %v1441 = vadd.f32 %v556, %v1440
        %v1442 = vpop.f32.mrf.mxu0
        %1443 = vdwg.mxu0
        %s1444 = scalar_lea.vmem %s237, 384 [#allocation2]
        %1445 = vst [vmem:[%s1444] sm:$0xff] %v1382
        %1446 = vst [vmem:[%s1444 + $0x8] sm:$0xff] %v1385
        %1447 = vst [vmem:[%s1444 + $0x10] sm:$0xff] %v1390
        %1448 = vst [vmem:[%s1444 + $0x18] sm:$0xff] %v1393
        %1449 = vst [vmem:[%s1444 + $0x20] sm:$0xff] %v1398
        %1450 = vst [vmem:[%s1444 + $0x28] sm:$0xff] %v1401
        %1451 = vst [vmem:[%s1444 + $0x30] sm:$0xff] %v1406
        %1452 = vst [vmem:[%s1444 + $0x38] sm:$0xff] %v1409
        %1453 = vst [vmem:[%s1444 + $0x40] sm:$0xff] %v1414
        %1454 = vst [vmem:[%s1444 + $0x48] sm:$0xff] %v1417
        %1455 = vst [vmem:[%s1444 + $0x50] sm:$0xff] %v1422
        %1456 = vst [vmem:[%s1444 + $0x58] sm:$0xff] %v1425
        %1457 = vst [vmem:[%s1444 + $0x60] sm:$0xff] %v1430
        %1458 = vst [vmem:[%s1444 + $0x68] sm:$0xff] %v1433
        %1459 = vst [vmem:[%s1444 + $0x70] sm:$0xff] %v1438
        %1460 = vst [vmem:[%s1444 + $0x78] sm:$0xff] %v1441
        %s1461 = sand.u32 %s153, 1
        %s1462 = scalar_lea.sflag [#allocation3], %s1461
        %s1463 = sand.u32 %s153, 1
        %s1464 = smul.addr %s1463, 512
        %s1465 = scalar_lea.vmem [#allocation2], %s1464
        // Predicated region
        $region41: #{tpu_custom_call.1} parent=39 // pred_check
          %p1466 = pneg %p163
        $region42: #{tpu_custom_call.1} parent=39 // pred_check_branch
          %1468 = sbr.rel (%p1466) target = $region44
        $region43: #{tpu_custom_call.1} parent=39 // pred_region
          %s1470 = ssub.s32 8192, 8192
          %1471 = vsyncadd %s1462, %s1470
          %s1472 = smul.addr %s23, 64
          %s1473 = sadd.s32 %s24, %s1472
          %s1474 = smul.addr %s1473, 128
          %s1475 = scalar_lea.hbm %s5, %s1474
          %s1476 = sshll.u32 %s1465, 4
          %s1477 = int_to_ptr.vmem [resolvable:$true] %s1476
          %1482 = dma.vmem_to_hbm [thread:$0]  %s1477, 8192, %s1475, %s1462, 128, 128, 8
        $region44: #{tpu_custom_call.1} parent=39 // pred_fallthru
          _
      $region40: #{tpu_custom_call.1} parent=5 // pred_fallthru
        _
      %p1483 = scmp.le.s32.totalorder 2, %s14
      // Predicated region
      $region45: #{tpu_custom_call.1} parent=5 // pred_check
        %p1484 = pneg %p1483
      $region46: #{tpu_custom_call.1} parent=5 // pred_check_branch
        %1486 = sbr.rel (%p1484) target = $region48
      $region47: #{tpu_custom_call.1} parent=5 // pred_region
        %s1487 = ssub.s32 %s14, 2
        // Predicated region
        $region49: #{tpu_custom_call.1} parent=47 // pred_check
          %p1488 = pneg %p169
        $region50: #{tpu_custom_call.1} parent=47 // pred_check_branch
          %1490 = sbr.rel (%p1488) target = $region52
        $region51: #{tpu_custom_call.1} parent=47 // pred_region
          %s1491 = sand.u32 %s154, 1
          %s1492 = scalar_lea.sflag [#allocation3], %s1491
          %s1493 = sand.u32 %s154, 1
          %s1494 = smul.addr %s1493, 512
          %s1495 = scalar_lea.vmem [#allocation2], %s1494
          %1496 = dma.done %s1492, 8192
        $region52: #{tpu_custom_call.1} parent=47 // pred_fallthru
          _
      $region48: #{tpu_custom_call.1} parent=5 // pred_fallthru
        _
    $region6: #{tpu_custom_call.1} parent=1 // loop_footer
      %s18 = sadd.s32 1, %s14
    $region7: #{tpu_custom_call.1} parent=1 // loop_footer_branch
      %13 = sbr.rel target = $region3
    $region8: #{tpu_custom_call.1} parent=1 // loop_exit
      _
    %1497 = vsyncpa [#allocation3], 1
    %s1498 = scalar_lea.sflag [#allocation3], 1
    %1499 = vsyncpa %s1498, 1

</llo_original>
